<compile_context>
chip_gen: v7x
topology: tpu7x:2x2x1
jax: 0.10.0
libtpu: 0.0.40
codegen_flags: <defaults>
</compile_context>

<pallas_src>
from functools import partial

import jax
import jax.numpy as jnp
from jax.experimental import pallas as pl
from jax.experimental.pallas import tpu as pltpu

GCN_HIDDEN1 = 200
GCN_HIDDEN2 = 200
_HID_PAD = 256            # lane-dense / MXU-friendly padding of the 200-wide hidden dims


def _round_up(x, m):
    return ((x + m - 1) // m) * m


def _pad_cast(x, shape, dtype=jnp.bfloat16):
    """Zero-pad a 2-D array up to `shape` and cast (bf16 MXU inputs)."""
    pads = [(0, s - d) for s, d in zip(shape, x.shape)]
    return jnp.pad(x, pads).astype(dtype)


def _tiling(n):
    """(n_pad, tm, tk): lane-dense node padding, row tile, contraction tile."""
    n_pad = _round_up(max(n, 128), 128)
    if n_pad <= 512:
        return n_pad, n_pad, n_pad          # single tile, whole (padded) graph
    # Larger graphs: bound VMEM independently of N by tiling both the row (tm)
    # and contraction (tk) dims of the adjacency.
    n_pad = _round_up(n, 512)
    return n_pad, 256, 512


def _vmem_limit(buffer_bytes):
    """Explicit scoped-VMEM budget: 2x buffers + headroom, floor 32MiB, cap 48MiB."""
    return int(min(max(2 * buffer_bytes + (8 << 20), 32 << 20), 48 << 20))


# --------------------------------------------------------------------------
# Kernel 1: row-tiled support build   supp_rows = x_rows @ W
# --------------------------------------------------------------------------
def _support_kernel(x_ref, w_ref, out_ref):
    out_ref[...] = jnp.dot(x_ref[...], w_ref[...],
                           preferred_element_type=jnp.float32).astype(out_ref.dtype)


def _build_support(x, w, *, tm):
    n_pad, f_pad = x.shape
    hid = w.shape[1]
    flops = 2 * n_pad * f_pad * hid
    bytes_accessed = (n_pad * f_pad + f_pad * hid + n_pad * hid) * 2
    vmem_bytes = (2 * tm * f_pad + 2 * f_pad * hid + 2 * tm * hid) * 2 + tm * hid * 4
    return pl.pallas_call(
        _support_kernel,
        out_shape=jax.ShapeDtypeStruct((n_pad, hid), jnp.bfloat16),
        grid_spec=pltpu.PrefetchScalarGridSpec(
            num_scalar_prefetch=0,
            grid=(n_pad // tm,),
            in_specs=[
                pl.BlockSpec((tm, f_pad), lambda r: (r, 0)),   # features row tile
                pl.BlockSpec((f_pad, hid), lambda r: (0, 0)),  # folded weight (constant)
            ],
            out_specs=pl.BlockSpec((tm, hid), lambda r: (r, 0)),
        ),
        compiler_params=pltpu.CompilerParams(
            dimension_semantics=("parallel",),
            vmem_limit_bytes=_vmem_limit(vmem_bytes)),
        cost_estimate=pl.CostEstimate(flops=flops, transcendentals=0,
                                      bytes_accessed=bytes_accessed),
    )(x, w)


# --------------------------------------------------------------------------
# Kernel 2/3: one GCN block.
#   grid = (row_tile r [parallel], contraction tile k [arbitrary, last])
#   acc(r) = feat_rows @ Wcat  (+ sum_k adj[r,k] @ supp[k])   in f32 VMEM scratch
#   hidden_rows = relu(acc);  optionally supp_next_rows = hidden_rows @ Wg_next
# --------------------------------------------------------------------------
def _gcn_block_kernel(adj_ref, supp_ref, feat_ref, wcat_ref, *rest, compute_next):
    if compute_next:
        wgn_ref, hid_ref, suppn_ref, acc_ref = rest
    else:
        hid_ref, acc_ref = rest

    k = pl.program_id(1)

    @pl.when(k == 0)
    def _():
        acc_ref[...] = jnp.dot(feat_ref[...], wcat_ref[...],
                               preferred_element_type=jnp.float32)

    acc_ref[...] += jnp.dot(adj_ref[...], supp_ref[...],
                            preferred_element_type=jnp.float32)

    @pl.when(k == pl.num_programs(1) - 1)
    def _():
        h = jnp.maximum(acc_ref[...], 0.0)
        # TODO(synk): nn.Dropout(0.5) is identity in eval mode; training-mode
        # masking would use pltpu.prng_seed / pltpu.prng_random_bits here.
        hid_ref[...] = h.astype(hid_ref.dtype)
        if compute_next:
            suppn_ref[...] = jnp.dot(
                h.astype(jnp.bfloat16), wgn_ref[...],
                preferred_element_type=jnp.float32).astype(suppn_ref.dtype)


def _gcn_block(adj_p, supp, feat_p, wcat, wg_next=None, *, tm, tk):
    n_pad = adj_p.shape[0]
    f_pad = feat_p.shape[1]
    hid = supp.shape[1]
    compute_next = wg_next is not None
    num_r = n_pad // tm
    num_k = n_pad // tk

    in_specs = [
        pl.BlockSpec((tm, tk), lambda r, k: (r, k)),        # adjacency tile
        pl.BlockSpec((tk, hid), lambda r, k: (k, 0)),       # support K-slice (streamed)
        pl.BlockSpec((tm, f_pad), lambda r, k: (r, 0)),     # features row tile
        pl.BlockSpec((f_pad, hid), lambda r, k: (0, 0)),    # folded cat weight (constant)
    ]
    operands = [adj_p, supp, feat_p, wcat]
    hid_spec = pl.BlockSpec((tm, hid), lambda r, k: (r, 0))
    if compute_next:
        in_specs.append(pl.BlockSpec((hid, hid), lambda r, k: (0, 0)))  # next GC weight
        operands.append(wg_next)
        out_shape = (jax.ShapeDtypeStruct((n_pad, hid), jnp.bfloat16),
                     jax.ShapeDtypeStruct((n_pad, hid), jnp.bfloat16))
        out_specs = (hid_spec, pl.BlockSpec((tm, hid), lambda r, k: (r, 0)))
    else:
        out_shape = jax.ShapeDtypeStruct((n_pad, hid), jnp.bfloat16)
        out_specs = hid_spec

    flops = 2 * n_pad * n_pad * hid + 2 * n_pad * f_pad * hid
    if compute_next:
        flops += 2 * n_pad * hid * hid
    bytes_accessed = (n_pad * n_pad + n_pad * f_pad + num_r * n_pad * hid
                      + f_pad * hid + (hid * hid if compute_next else 0)
                      + (2 if compute_next else 1) * n_pad * hid) * 2

    vmem_bytes = 2 * (tm * tk + tk * hid + tm * f_pad) * 2          # streamed inputs
    vmem_bytes += (2 * f_pad * hid + (2 * hid * hid if compute_next else 0)) * 2
    vmem_bytes += 2 * (2 if compute_next else 1) * tm * hid * 2     # outputs
    vmem_bytes += tm * hid * 4                                      # f32 accumulator

    return pl.pallas_call(
        partial(_gcn_block_kernel, compute_next=compute_next),
        out_shape=out_shape,
        grid_spec=pltpu.PrefetchScalarGridSpec(
            num_scalar_prefetch=0,
            grid=(num_r, num_k),
            in_specs=in_specs,
            out_specs=out_specs,
            scratch_shapes=[pltpu.VMEM((tm, hid), jnp.float32)],
        ),
        compiler_params=pltpu.CompilerParams(
            dimension_semantics=("parallel", "arbitrary"),
            vmem_limit_bytes=_vmem_limit(vmem_bytes)),
        cost_estimate=pl.CostEstimate(flops=flops, transcendentals=0,
                                      bytes_accessed=bytes_accessed),
    )(*operands)


# --------------------------------------------------------------------------
# Host-side weight preparation and forward wrapper
# --------------------------------------------------------------------------
def _prepare_kernel_params(params, f_pad):
    """Fold, pad (200->256, F->f_pad) and cast the module weights for the kernels."""
    h1, h2 = GCN_HIDDEN1, GCN_HIDDEN2
    wt1 = params["trans_h_w"].T      # [h1 + F, h1]   (nn.Linear weight is [out, in])
    wt2 = params["trans_h1_w"].T     # [h2 + F, h2]
    wt1_gc, wt1_cat = wt1[:h1], wt1[h1:]
    wt2_gc, wt2_cat = wt2[:h2], wt2[h2:]
    # Associativity fold: (adj @ (x @ Wg)) @ Wt_gc == adj @ (x @ (Wg @ Wt_gc))
    wg1_fold = params["gc_input_w"] @ wt1_gc      # [F,  h1]
    wg2_fold = params["gc_hidden1_w"] @ wt2_gc    # [h1, h2]
    return {
        "wg1_fold": _pad_cast(wg1_fold, (f_pad, _HID_PAD)),
        "wt1_cat":  _pad_cast(wt1_cat,  (f_pad, _HID_PAD)),
        "wg2_fold": _pad_cast(wg2_fold, (_HID_PAD, _HID_PAD)),
        "wt2_cat":  _pad_cast(wt2_cat,  (f_pad, _HID_PAD)),
    }


@jax.jit
def gcn_encoder_forward(features, adj, params):
    """Pallas forward pass. Returns (hidden1, hidden2) like the PyTorch module."""
    n, f = features.shape
    f_pad = _round_up(max(f, 128), 128)
    n_pad, tm, tk = _tiling(n)

    kp = _prepare_kernel_params(params, f_pad)
    feat_p = _pad_cast(features, (n_pad, f_pad))
    adj_p = _pad_cast(adj, (n_pad, n_pad))

    # Block 1: supp1 = feat @ (Wg1 @ Wt1_gc);  h1 = relu(adj @ supp1 + feat @ Wt1_cat)
    #          supp2 = h1 @ (Wg2 @ Wt2_gc)     (fused into the same kernel)
    supp1 = _build_support(feat_p, kp["wg1_fold"], tm=tm)
    hidden1, supp2 = _gcn_block(adj_p, supp1, feat_p, kp["wt1_cat"],
                                kp["wg2_fold"], tm=tm, tk=tk)
    # Block 2: h2 = relu(adj @ supp2 + feat @ Wt2_cat)
    hidden2 = _gcn_block(adj_p, supp2, feat_p, kp["wt2_cat"], tm=tm, tk=tk)

    # Slice off padding; restore the module's float32 output dtype during the copy.
    h1 = hidden1[:n, :GCN_HIDDEN1].astype(jnp.float32)
    h2 = hidden2[:n, :GCN_HIDDEN2].astype(jnp.float32)
    return h1, h2


def init_params(key, num_features):
    """Deterministic synthetic parameters with the module's shapes (bias=False)."""
    k1, k2, k3, k4 = jax.random.split(key, 4)
    h1, h2 = GCN_HIDDEN1, GCN_HIDDEN2
    return {
        # SparseGraphConvolution weights: [in_features, out_features]
        "gc_input_w": jax.random.normal(k1, (num_features, h1), jnp.float32) * 0.1,
        "gc_hidden1_w": jax.random.normal(k2, (h1, h2), jnp.float32) * 0.1,
        # nn.Linear weights: [out_features, in_features], bias=False
        "trans_h_w": jax.random.normal(k3, (h1, h1 + num_features), jnp.float32) * 0.1,
        "trans_h1_w": jax.random.normal(k4, (h2, h2 + num_features), jnp.float32) * 0.1,
    }


def reference_forward_f32(features, adj, params):
    """Pure-f32 jnp reference mirroring the PyTorch forward (eval mode) literally."""
    gc1 = adj @ (features @ params["gc_input_w"])
    h1 = jax.nn.relu(jnp.concatenate([gc1, features], axis=1) @ params["trans_h_w"].T)
    gc2 = adj @ (h1 @ params["gc_hidden1_w"])
    h2 = jax.nn.relu(jnp.concatenate([gc2, features], axis=1) @ params["trans_h1_w"].T)
    return h1, h2


def mirror_reference(features, adj, params):
    """jnp mirror of the kernel numerics (folded weights, bf16 inputs/outputs, f32 accum)."""
    n, f = features.shape
    f_pad = _round_up(max(f, 128), 128)
    n_pad, _, _ = _tiling(n)
    kp = _prepare_kernel_params(params, f_pad)
    feat_p = _pad_cast(features, (n_pad, f_pad))
    adj_p = _pad_cast(adj, (n_pad, n_pad))
    f32, bf16 = jnp.float32, jnp.bfloat16

    supp1 = jnp.dot(feat_p, kp["wg1_fold"], preferred_element_type=f32).astype(bf16)
    h1 = jnp.maximum(jnp.dot(adj_p, supp1, preferred_element_type=f32)
                     + jnp.dot(feat_p, kp["wt1_cat"], preferred_element_type=f32), 0.0)
    supp2 = jnp.dot(h1.astype(bf16), kp["wg2_fold"],
                    preferred_element_type=f32).astype(bf16)
    h2 = jnp.maximum(jnp.dot(adj_p, supp2, preferred_element_type=f32)
                     + jnp.dot(feat_p, kp["wt2_cat"], preferred_element_type=f32), 0.0)
    return (h1.astype(bf16)[:n, :GCN_HIDDEN1].astype(f32),
            h2.astype(bf16)[:n, :GCN_HIDDEN2].astype(f32))


if __name__ == "__main__":
    num_nodes = 16
    num_features = 32

    key = jax.random.PRNGKey(0)
    k_feat, k_adj, k_params = jax.random.split(key, 3)

    features = jax.random.normal(k_feat, (num_nodes, num_features), jnp.float32)

    # Symmetric, normalized dense adjacency (stand-in for the sparse adj).
    a = (jax.random.uniform(k_adj, (num_nodes, num_nodes)) > 0.7).astype(jnp.float32)
    a = jnp.maximum(a, a.T) + jnp.eye(num_nodes, dtype=jnp.float32)
    d_inv_sqrt = 1.0 / jnp.sqrt(a.sum(axis=1))
    adj = d_inv_sqrt[:, None] * a * d_inv_sqrt[None, :]

    params = init_params(k_params, num_features)

    hidden1, hidden2 = gcn_encoder_forward(features, adj, params)
    hidden1 = jax.block_until_ready(hidden1)
    hidden2 = jax.block_until_ready(hidden2)

    assert hidden1.shape == (num_nodes, GCN_HIDDEN1)
    assert hidden2.shape == (num_nodes, GCN_HIDDEN2)

    # Check against a jnp mirror of the kernel numerics (bf16 inputs/outputs, f32 accum).
    m1, m2 = mirror_reference(features, adj, params)
    assert jnp.allclose(hidden1, m1, atol=2e-2, rtol=2e-2)
    assert jnp.allclose(hidden2, m2, atol=2e-2, rtol=2e-2)

    # Sanity check against the full-f32, unfolded PyTorch-style math
    # (bf16 matmul inputs/outputs limit agreement to ~bf16 precision).
    r1, r2 = reference_forward_f32(features, adj, params)
    rel1 = jnp.linalg.norm(hidden1 - r1) / jnp.linalg.norm(r1)
    rel2 = jnp.linalg.norm(hidden2 - r2) / jnp.linalg.norm(r2)
    assert float(rel1) < 5e-2 and float(rel2) < 5e-2

    print("KERNEL_OK")
</pallas_src>

<mosaic_0001>
module attributes {stable_mosaic.version = 11 : i64} {
  func.func @_support_kernel(%arg0: i32, %arg1: memref<128x128xbf16, #tpu.memory_space<vmem>>, %arg2: memref<128x256xbf16, #tpu.memory_space<vmem>>, %arg3: memref<128x256xbf16, #tpu.memory_space<vmem>>) attributes {dimension_semantics = [#tpu.dimension_semantics<parallel>], iteration_bounds = array<i64: 1>, scalar_prefetch = 0 : i64, scratch_operands = 0 : i64, tpu.core_type = #tpu.core_type<tc>, window_params = [{transform_indices = @transform_0, window_bounds = array<i64: 128, 128>}, {pipeline_mode = #tpu.pipeline_mode<synchronous>, transform_indices = @transform_1, window_bounds = array<i64: 128, 256>}, {transform_indices = @transform_2, window_bounds = array<i64: 128, 256>}]} {
    %c0 = arith.constant 0 : index
    %c0_0 = arith.constant 0 : index
    %0 = vector.load %arg1[%c0, %c0_0] : memref<128x128xbf16, #tpu.memory_space<vmem>>, vector<128x128xbf16>
    %c0_1 = arith.constant 0 : index
    %c0_2 = arith.constant 0 : index
    %1 = vector.load %arg2[%c0_1, %c0_2] : memref<128x256xbf16, #tpu.memory_space<vmem>>, vector<128x256xbf16>
    %cst = arith.constant dense<0.000000e+00> : vector<128x256xf32>
    %2 = tpu.matmul %0, %1, %cst {dimension_numbers = #tpu.dot_dimension_numbers<[1], [0], [0], [1], [0, 0, 1, 1], [], []>} : vector<128x128xbf16>, vector<128x256xbf16>, vector<128x256xf32> -> vector<128x256xf32>
    %3 = arith.truncf %2 : vector<128x256xf32> to vector<128x256xbf16>
    %c0_3 = arith.constant 0 : index
    %c0_4 = arith.constant 0 : index
    %4 = vector.load %arg3[%c0_3, %c0_4] : memref<128x256xbf16, #tpu.memory_space<vmem>>, vector<128x256xbf16>
    tpu.vector_store %arg3[%c0_3, %c0_4], %3 {strides = array<i32>} : memref<128x256xbf16, #tpu.memory_space<vmem>>, vector<128x256xbf16>,
    return
  }
  func.func @transform_0(%arg0: i32) -> (i32, i32) {
    %c0_i32 = arith.constant 0 : i32
    %c0_i32_0 = arith.constant 0 : i32
    return %arg0, %c0_i32 : i32, i32
  }
  func.func @transform_1(%arg0: i32) -> (i32, i32) {
    %c0_i32 = arith.constant 0 : i32
    %c0_i32_0 = arith.constant 0 : i32
    %c0_i32_1 = arith.constant 0 : i32
    return %c0_i32, %c0_i32_0 : i32, i32
  }
  func.func @transform_2(%arg0: i32) -> (i32, i32) {
    %c0_i32 = arith.constant 0 : i32
    %c0_i32_0 = arith.constant 0 : i32
    return %arg0, %c0_i32 : i32, i32
  }
}

module attributes {stable_mosaic.version = 11 : i64} {
  func.func @_gcn_block_kernel(%arg0: i32, %arg1: i32, %arg2: memref<128x128xbf16, #tpu.memory_space<vmem>>, %arg3: memref<128x256xbf16, #tpu.memory_space<vmem>>, %arg4: memref<128x128xbf16, #tpu.memory_space<vmem>>, %arg5: memref<128x256xbf16, #tpu.memory_space<vmem>>, %arg6: memref<256x256xbf16, #tpu.memory_space<vmem>>, %arg7: memref<128x256xbf16, #tpu.memory_space<vmem>>, %arg8: memref<128x256xbf16, #tpu.memory_space<vmem>>, %arg9: memref<128x256xf32, #tpu.memory_space<vmem>>) attributes {dimension_semantics = [#tpu.dimension_semantics<parallel>, #tpu.dimension_semantics<arbitrary>], iteration_bounds = array<i64: 1, 1>, scalar_prefetch = 0 : i64, scratch_operands = 1 : i64, tpu.core_type = #tpu.core_type<tc>, window_params = [{transform_indices = @transform_0, window_bounds = array<i64: 128, 128>}, {transform_indices = @transform_1, window_bounds = array<i64: 128, 256>}, {transform_indices = @transform_2, window_bounds = array<i64: 128, 128>}, {pipeline_mode = #tpu.pipeline_mode<synchronous>, transform_indices = @transform_3, window_bounds = array<i64: 128, 256>}, {pipeline_mode = #tpu.pipeline_mode<synchronous>, transform_indices = @transform_4, window_bounds = array<i64: 256, 256>}, {transform_indices = @transform_5, window_bounds = array<i64: 128, 256>}, {transform_indices = @transform_6, window_bounds = array<i64: 128, 256>}]} {
    %c0_i32 = arith.constant 0 : i32
    %0 = arith.cmpi eq, %arg1, %c0_i32 : i32
    %1 = arith.extui %0 : i1 to i32
    %c0_i32_0 = arith.constant 0 : i32
    %2 = arith.cmpi ne, %1, %c0_i32_0 : i32
    scf.if %2 {
      %c0_10 = arith.constant 0 : index
      %c0_11 = arith.constant 0 : index
      %12 = vector.load %arg4[%c0_10, %c0_11] : memref<128x128xbf16, #tpu.memory_space<vmem>>, vector<128x128xbf16>
      %c0_12 = arith.constant 0 : index
      %c0_13 = arith.constant 0 : index
      %13 = vector.load %arg5[%c0_12, %c0_13] : memref<128x256xbf16, #tpu.memory_space<vmem>>, vector<128x256xbf16>
      %cst_14 = arith.constant dense<0.000000e+00> : vector<128x256xf32>
      %14 = tpu.matmul %12, %13, %cst_14 {dimension_numbers = #tpu.dot_dimension_numbers<[1], [0], [0], [1], [0, 0, 1, 1], [], []>} : vector<128x128xbf16>, vector<128x256xbf16>, vector<128x256xf32> -> vector<128x256xf32>
      %c0_15 = arith.constant 0 : index
      %c0_16 = arith.constant 0 : index
      %15 = vector.load %arg9[%c0_15, %c0_16] : memref<128x256xf32, #tpu.memory_space<vmem>>, vector<128x256xf32>
      tpu.vector_store %arg9[%c0_15, %c0_16], %14 {strides = array<i32>} : memref<128x256xf32, #tpu.memory_space<vmem>>, vector<128x256xf32>,
    } else {
    }
    %c0 = arith.constant 0 : index
    %c0_1 = arith.constant 0 : index
    %3 = vector.load %arg9[%c0, %c0_1] : memref<128x256xf32, #tpu.memory_space<vmem>>, vector<128x256xf32>
    %c0_2 = arith.constant 0 : index
    %c0_3 = arith.constant 0 : index
    %4 = vector.load %arg2[%c0_2, %c0_3] : memref<128x128xbf16, #tpu.memory_space<vmem>>, vector<128x128xbf16>
    %c0_4 = arith.constant 0 : index
    %c0_5 = arith.constant 0 : index
    %5 = vector.load %arg3[%c0_4, %c0_5] : memref<128x256xbf16, #tpu.memory_space<vmem>>, vector<128x256xbf16>
    %cst = arith.constant dense<0.000000e+00> : vector<128x256xf32>
    %6 = tpu.matmul %4, %5, %cst {dimension_numbers = #tpu.dot_dimension_numbers<[1], [0], [0], [1], [0, 0, 1, 1], [], []>} : vector<128x128xbf16>, vector<128x256xbf16>, vector<128x256xf32> -> vector<128x256xf32>
    %7 = arith.addf %3, %6 : vector<128x256xf32>
    %c0_6 = arith.constant 0 : index
    %c0_7 = arith.constant 0 : index
    %8 = vector.load %arg9[%c0_6, %c0_7] : memref<128x256xf32, #tpu.memory_space<vmem>>, vector<128x256xf32>
    tpu.vector_store %arg9[%c0_6, %c0_7], %7 {strides = array<i32>} : memref<128x256xf32, #tpu.memory_space<vmem>>, vector<128x256xf32>,
    %c0_i32_8 = arith.constant 0 : i32
    %9 = arith.cmpi eq, %arg1, %c0_i32_8 : i32
    %10 = arith.extui %9 : i1 to i32
    %c0_i32_9 = arith.constant 0 : i32
    %11 = arith.cmpi ne, %10, %c0_i32_9 : i32
    scf.if %11 {
      %c0_10 = arith.constant 0 : index
      %c0_11 = arith.constant 0 : index
      %12 = vector.load %arg9[%c0_10, %c0_11] : memref<128x256xf32, #tpu.memory_space<vmem>>, vector<128x256xf32>
      %cst_12 = arith.constant 0.000000e+00 : f32
      %13 = vector.broadcast %cst_12 : f32 to vector<128x256xf32>
      %14 = arith.maximumf %12, %13 : vector<128x256xf32>
      %15 = arith.truncf %14 : vector<128x256xf32> to vector<128x256xbf16>
      %c0_13 = arith.constant 0 : index
      %c0_14 = arith.constant 0 : index
      %16 = vector.load %arg7[%c0_13, %c0_14] : memref<128x256xbf16, #tpu.memory_space<vmem>>, vector<128x256xbf16>
      tpu.vector_store %arg7[%c0_13, %c0_14], %15 {strides = array<i32>} : memref<128x256xbf16, #tpu.memory_space<vmem>>, vector<128x256xbf16>,
      %17 = arith.truncf %14 : vector<128x256xf32> to vector<128x256xbf16>
      %c0_15 = arith.constant 0 : index
      %c0_16 = arith.constant 0 : index
      %18 = vector.load %arg6[%c0_15, %c0_16] : memref<256x256xbf16, #tpu.memory_space<vmem>>, vector<256x256xbf16>
      %cst_17 = arith.constant dense<0.000000e+00> : vector<128x256xf32>
      %19 = tpu.matmul %17, %18, %cst_17 {dimension_numbers = #tpu.dot_dimension_numbers<[1], [0], [0], [1], [0, 0, 1, 1], [], []>} : vector<128x256xbf16>, vector<256x256xbf16>, vector<128x256xf32> -> vector<128x256xf32>
      %20 = arith.truncf %19 : vector<128x256xf32> to vector<128x256xbf16>
      %c0_18 = arith.constant 0 : index
      %c0_19 = arith.constant 0 : index
      %21 = vector.load %arg8[%c0_18, %c0_19] : memref<128x256xbf16, #tpu.memory_space<vmem>>, vector<128x256xbf16>
      tpu.vector_store %arg8[%c0_18, %c0_19], %20 {strides = array<i32>} : memref<128x256xbf16, #tpu.memory_space<vmem>>, vector<128x256xbf16>,
    } else {
    }
    return
  }
  func.func @transform_0(%arg0: i32, %arg1: i32) -> (i32, i32) {
    %c0_i32 = arith.constant 0 : i32
    return %arg0, %arg1 : i32, i32
  }
  func.func @transform_1(%arg0: i32, %arg1: i32) -> (i32, i32) {
    %c0_i32 = arith.constant 0 : i32
    %c0_i32_0 = arith.constant 0 : i32
    return %arg1, %c0_i32 : i32, i32
  }
  func.func @transform_2(%arg0: i32, %arg1: i32) -> (i32, i32) {
    %c0_i32 = arith.constant 0 : i32
    %c0_i32_0 = arith.constant 0 : i32
    return %arg0, %c0_i32 : i32, i32
  }
  func.func @transform_3(%arg0: i32, %arg1: i32) -> (i32, i32) {
    %c0_i32 = arith.constant 0 : i32
    %c0_i32_0 = arith.constant 0 : i32
    %c0_i32_1 = arith.constant 0 : i32
    return %c0_i32, %c0_i32_0 : i32, i32
  }
  func.func @transform_4(%arg0: i32, %arg1: i32) -> (i32, i32) {
    %c0_i32 = arith.constant 0 : i32
    %c0_i32_0 = arith.constant 0 : i32
    %c0_i32_1 = arith.constant 0 : i32
    return %c0_i32, %c0_i32_0 : i32, i32
  }
  func.func @transform_5(%arg0: i32, %arg1: i32) -> (i32, i32) {
    %c0_i32 = arith.constant 0 : i32
    %c0_i32_0 = arith.constant 0 : i32
    return %arg0, %c0_i32 : i32, i32
  }
  func.func @transform_6(%arg0: i32, %arg1: i32) -> (i32, i32) {
    %c0_i32 = arith.constant 0 : i32
    %c0_i32_0 = arith.constant 0 : i32
    return %arg0, %c0_i32 : i32, i32
  }
}

module attributes {stable_mosaic.version = 11 : i64} {
  func.func @_gcn_block_kernel(%arg0: i32, %arg1: i32, %arg2: memref<128x128xbf16, #tpu.memory_space<vmem>>, %arg3: memref<128x256xbf16, #tpu.memory_space<vmem>>, %arg4: memref<128x128xbf16, #tpu.memory_space<vmem>>, %arg5: memref<128x256xbf16, #tpu.memory_space<vmem>>, %arg6: memref<128x256xbf16, #tpu.memory_space<vmem>>, %arg7: memref<128x256xf32, #tpu.memory_space<vmem>>) attributes {dimension_semantics = [#tpu.dimension_semantics<parallel>, #tpu.dimension_semantics<arbitrary>], iteration_bounds = array<i64: 1, 1>, scalar_prefetch = 0 : i64, scratch_operands = 1 : i64, tpu.core_type = #tpu.core_type<tc>, window_params = [{transform_indices = @transform_0, window_bounds = array<i64: 128, 128>}, {transform_indices = @transform_1, window_bounds = array<i64: 128, 256>}, {transform_indices = @transform_2, window_bounds = array<i64: 128, 128>}, {pipeline_mode = #tpu.pipeline_mode<synchronous>, transform_indices = @transform_3, window_bounds = array<i64: 128, 256>}, {transform_indices = @transform_4, window_bounds = array<i64: 128, 256>}]} {
    %c0_i32 = arith.constant 0 : i32
    %0 = arith.cmpi eq, %arg1, %c0_i32 : i32
    %1 = arith.extui %0 : i1 to i32
    %c0_i32_0 = arith.constant 0 : i32
    %2 = arith.cmpi ne, %1, %c0_i32_0 : i32
    scf.if %2 {
      %c0_10 = arith.constant 0 : index
      %c0_11 = arith.constant 0 : index
      %12 = vector.load %arg4[%c0_10, %c0_11] : memref<128x128xbf16, #tpu.memory_space<vmem>>, vector<128x128xbf16>
      %c0_12 = arith.constant 0 : index
      %c0_13 = arith.constant 0 : index
      %13 = vector.load %arg5[%c0_12, %c0_13] : memref<128x256xbf16, #tpu.memory_space<vmem>>, vector<128x256xbf16>
      %cst_14 = arith.constant dense<0.000000e+00> : vector<128x256xf32>
      %14 = tpu.matmul %12, %13, %cst_14 {dimension_numbers = #tpu.dot_dimension_numbers<[1], [0], [0], [1], [0, 0, 1, 1], [], []>} : vector<128x128xbf16>, vector<128x256xbf16>, vector<128x256xf32> -> vector<128x256xf32>
      %c0_15 = arith.constant 0 : index
      %c0_16 = arith.constant 0 : index
      %15 = vector.load %arg7[%c0_15, %c0_16] : memref<128x256xf32, #tpu.memory_space<vmem>>, vector<128x256xf32>
      tpu.vector_store %arg7[%c0_15, %c0_16], %14 {strides = array<i32>} : memref<128x256xf32, #tpu.memory_space<vmem>>, vector<128x256xf32>,
    } else {
    }
    %c0 = arith.constant 0 : index
    %c0_1 = arith.constant 0 : index
    %3 = vector.load %arg7[%c0, %c0_1] : memref<128x256xf32, #tpu.memory_space<vmem>>, vector<128x256xf32>
    %c0_2 = arith.constant 0 : index
    %c0_3 = arith.constant 0 : index
    %4 = vector.load %arg2[%c0_2, %c0_3] : memref<128x128xbf16, #tpu.memory_space<vmem>>, vector<128x128xbf16>
    %c0_4 = arith.constant 0 : index
    %c0_5 = arith.constant 0 : index
    %5 = vector.load %arg3[%c0_4, %c0_5] : memref<128x256xbf16, #tpu.memory_space<vmem>>, vector<128x256xbf16>
    %cst = arith.constant dense<0.000000e+00> : vector<128x256xf32>
    %6 = tpu.matmul %4, %5, %cst {dimension_numbers = #tpu.dot_dimension_numbers<[1], [0], [0], [1], [0, 0, 1, 1], [], []>} : vector<128x128xbf16>, vector<128x256xbf16>, vector<128x256xf32> -> vector<128x256xf32>
    %7 = arith.addf %3, %6 : vector<128x256xf32>
    %c0_6 = arith.constant 0 : index
    %c0_7 = arith.constant 0 : index
    %8 = vector.load %arg7[%c0_6, %c0_7] : memref<128x256xf32, #tpu.memory_space<vmem>>, vector<128x256xf32>
    tpu.vector_store %arg7[%c0_6, %c0_7], %7 {strides = array<i32>} : memref<128x256xf32, #tpu.memory_space<vmem>>, vector<128x256xf32>,
    %c0_i32_8 = arith.constant 0 : i32
    %9 = arith.cmpi eq, %arg1, %c0_i32_8 : i32
    %10 = arith.extui %9 : i1 to i32
    %c0_i32_9 = arith.constant 0 : i32
    %11 = arith.cmpi ne, %10, %c0_i32_9 : i32
    scf.if %11 {
      %c0_10 = arith.constant 0 : index
      %c0_11 = arith.constant 0 : index
      %12 = vector.load %arg7[%c0_10, %c0_11] : memref<128x256xf32, #tpu.memory_space<vmem>>, vector<128x256xf32>
      %cst_12 = arith.constant 0.000000e+00 : f32
      %13 = vector.broadcast %cst_12 : f32 to vector<128x256xf32>
      %14 = arith.maximumf %12, %13 : vector<128x256xf32>
      %15 = arith.truncf %14 : vector<128x256xf32> to vector<128x256xbf16>
      %c0_13 = arith.constant 0 : index
      %c0_14 = arith.constant 0 : index
      %16 = vector.load %arg6[%c0_13, %c0_14] : memref<128x256xbf16, #tpu.memory_space<vmem>>, vector<128x256xbf16>
      tpu.vector_store %arg6[%c0_13, %c0_14], %15 {strides = array<i32>} : memref<128x256xbf16, #tpu.memory_space<vmem>>, vector<128x256xbf16>,
    } else {
    }
    return
  }
  func.func @transform_0(%arg0: i32, %arg1: i32) -> (i32, i32) {
    %c0_i32 = arith.constant 0 : i32
    return %arg0, %arg1 : i32, i32
  }
  func.func @transform_1(%arg0: i32, %arg1: i32) -> (i32, i32) {
    %c0_i32 = arith.constant 0 : i32
    %c0_i32_0 = arith.constant 0 : i32
    return %arg1, %c0_i32 : i32, i32
  }
  func.func @transform_2(%arg0: i32, %arg1: i32) -> (i32, i32) {
    %c0_i32 = arith.constant 0 : i32
    %c0_i32_0 = arith.constant 0 : i32
    return %arg0, %c0_i32 : i32, i32
  }
  func.func @transform_3(%arg0: i32, %arg1: i32) -> (i32, i32) {
    %c0_i32 = arith.constant 0 : i32
    %c0_i32_0 = arith.constant 0 : i32
    %c0_i32_1 = arith.constant 0 : i32
    return %c0_i32, %c0_i32_0 : i32, i32
  }
  func.func @transform_4(%arg0: i32, %arg1: i32) -> (i32, i32) {
    %c0_i32 = arith.constant 0 : i32
    %c0_i32_0 = arith.constant 0 : i32
    return %arg0, %c0_i32 : i32, i32
  }
}

</mosaic_0001>

<llo_original>
// kernel: gcn_encoder_forward.3
$region0: #{gcn_encoder_forward.3}
  #allocation0 [shape = 'u32[]', space=smem, size = 0x4, offset = 0x4, fixed_abs, tag = 'smem constant byte address 0x4 - core index']
  #allocation1 [shape = 'u32[144,128]{1,0:T(1,128)}', space=vmem, size = 0x12000, scoped, tag = 'internal scratch']
  %s0 = inlined_call_operand.vmem [shape: bf16[128,128], index: 0, kind: input, shape index: {}]
  %s1 = inlined_call_operand.vmem [shape: bf16[128,256], index: 1, kind: input, shape index: {}]
  %s2 = inlined_call_operand.vmem [shape: bf16[128,256], index: 2, kind: output, shape index: {}]
  %s3 = sld [smem:[#allocation0]]
  $region18: #{gcn_encoder_forward.3} parent=0
    _
  %s5 = ssub.s32 1, %s3
  %s6 = scalar_select 0, %s5, %s3
  // Predicated region
  $region2: #{gcn_encoder_forward.3} parent=0 // pred_check
    _
  $region3: #{gcn_encoder_forward.3} parent=0 // pred_check_branch
    %8 = sbr.rel (0) target = $region5
  $region4: #{gcn_encoder_forward.3} parent=0 // pred_region
    _
  $region5: #{gcn_encoder_forward.3} parent=0 // pred_fallthru
    _
  // Predicated region
  $region6: #{gcn_encoder_forward.3} parent=0 // pred_check
    _
  $region7: #{gcn_encoder_forward.3} parent=0 // pred_check_branch
    %10 = sbr.rel (0) target = $region9
  $region8: #{gcn_encoder_forward.3} parent=0 // pred_region
    _
  $region9: #{gcn_encoder_forward.3} parent=0 // pred_fallthru
    _
  %v12 = vld [vmem:[%s0] sm:$0xf]
  %v13 = vld [vmem:[%s0 + $0x4] sm:$0xf]
  %v14 = vld [vmem:[%s0 + $0x8] sm:$0xf]
  %v15 = vld [vmem:[%s0 + $0xc] sm:$0xf]
  %v16 = vld [vmem:[%s0 + $0x10] sm:$0xf]
  %v17 = vld [vmem:[%s0 + $0x14] sm:$0xf]
  %v18 = vld [vmem:[%s0 + $0x18] sm:$0xf]
  %v19 = vld [vmem:[%s0 + $0x1c] sm:$0xf]
  %v20 = vld [vmem:[%s0 + $0x20] sm:$0xf]
  %v21 = vld [vmem:[%s0 + $0x24] sm:$0xf]
  %v22 = vld [vmem:[%s0 + $0x28] sm:$0xf]
  %v23 = vld [vmem:[%s0 + $0x2c] sm:$0xf]
  %v24 = vld [vmem:[%s0 + $0x30] sm:$0xf]
  %v25 = vld [vmem:[%s0 + $0x34] sm:$0xf]
  %v26 = vld [vmem:[%s0 + $0x38] sm:$0xf]
  %v27 = vld [vmem:[%s0 + $0x3c] sm:$0xf]
  %v28 = vld [vmem:[%s1] sm:$0xff]
  %v29 = vld [vmem:[%s1 + $0x8] sm:$0xff]
  %v30 = vld [vmem:[%s1 + $0x10] sm:$0xff]
  %v31 = vld [vmem:[%s1 + $0x18] sm:$0xff]
  %v32 = vld [vmem:[%s1 + $0x20] sm:$0xff]
  %v33 = vld [vmem:[%s1 + $0x28] sm:$0xff]
  %v34 = vld [vmem:[%s1 + $0x30] sm:$0xff]
  %v35 = vld [vmem:[%s1 + $0x38] sm:$0xff]
  %v36 = vld [vmem:[%s1 + $0x40] sm:$0xff]
  %v37 = vld [vmem:[%s1 + $0x48] sm:$0xff]
  %v38 = vld [vmem:[%s1 + $0x50] sm:$0xff]
  %v39 = vld [vmem:[%s1 + $0x58] sm:$0xff]
  %v40 = vld [vmem:[%s1 + $0x60] sm:$0xff]
  %v41 = vld [vmem:[%s1 + $0x68] sm:$0xff]
  %v42 = vld [vmem:[%s1 + $0x70] sm:$0xff]
  %v43 = vld [vmem:[%s1 + $0x78] sm:$0xff]
  %v60 = vunpack.c.l.b16 %v12
  %v61 = vunpack.c.l.b16 %v13
  %v62 = vunpack.c.l.b16 %v14
  %v63 = vunpack.c.l.b16 %v15
  %v64 = vunpack.c.l.b16 %v16
  %v65 = vunpack.c.l.b16 %v17
  %v66 = vunpack.c.l.b16 %v18
  %v67 = vunpack.c.l.b16 %v19
  %v68 = vunpack.c.l.b16 %v20
  %v69 = vunpack.c.l.b16 %v21
  %v70 = vunpack.c.l.b16 %v22
  %v71 = vunpack.c.l.b16 %v23
  %v72 = vunpack.c.l.b16 %v24
  %v73 = vunpack.c.l.b16 %v25
  %v74 = vunpack.c.l.b16 %v26
  %v75 = vunpack.c.l.b16 %v27
  %v76 = vpack.c.b16 %v61, %v60
  %v77 = vpack.c.b16 %v63, %v62
  %v78 = vpack.c.b16 %v65, %v64
  %v79 = vpack.c.b16 %v67, %v66
  %v80 = vpack.c.b16 %v69, %v68
  %v81 = vpack.c.b16 %v71, %v70
  %v82 = vpack.c.b16 %v73, %v72
  %v83 = vpack.c.b16 %v75, %v74
  %v108 = vunpack.c.l.b16 %v28
  %v109 = vunpack.c.h.b16 %v28
  %v110 = vunpack.c.l.b16 %v29
  %v111 = vunpack.c.h.b16 %v29
  %v112 = vunpack.c.l.b16 %v30
  %v113 = vunpack.c.h.b16 %v30
  %v114 = vunpack.c.l.b16 %v31
  %v115 = vunpack.c.h.b16 %v31
  %v116 = vunpack.c.l.b16 %v32
  %v117 = vunpack.c.h.b16 %v32
  %v118 = vunpack.c.l.b16 %v33
  %v119 = vunpack.c.h.b16 %v33
  %v120 = vunpack.c.l.b16 %v34
  %v121 = vunpack.c.h.b16 %v34
  %v122 = vunpack.c.l.b16 %v35
  %v123 = vunpack.c.h.b16 %v35
  %v124 = vunpack.c.l.b16 %v36
  %v125 = vunpack.c.h.b16 %v36
  %v126 = vunpack.c.l.b16 %v37
  %v127 = vunpack.c.h.b16 %v37
  %v128 = vunpack.c.l.b16 %v38
  %v129 = vunpack.c.h.b16 %v38
  %v130 = vunpack.c.l.b16 %v39
  %v131 = vunpack.c.h.b16 %v39
  %v132 = vunpack.c.l.b16 %v40
  %v133 = vunpack.c.h.b16 %v40
  %v134 = vunpack.c.l.b16 %v41
  %v135 = vunpack.c.h.b16 %v41
  %v136 = vunpack.c.l.b16 %v42
  %v137 = vunpack.c.h.b16 %v42
  %v138 = vunpack.c.l.b16 %v43
  %v139 = vunpack.c.h.b16 %v43
  %v140 = vpack.c.b16 %v110, %v108
  %v141 = vpack.c.b16 %v111, %v109
  %v142 = vpack.c.b16 %v114, %v112
  %v143 = vpack.c.b16 %v115, %v113
  %v144 = vpack.c.b16 %v118, %v116
  %v145 = vpack.c.b16 %v119, %v117
  %v146 = vpack.c.b16 %v122, %v120
  %v147 = vpack.c.b16 %v123, %v121
  %v148 = vpack.c.b16 %v126, %v124
  %v149 = vpack.c.b16 %v127, %v125
  %v150 = vpack.c.b16 %v130, %v128
  %v151 = vpack.c.b16 %v131, %v129
  %v152 = vpack.c.b16 %v134, %v132
  %v153 = vpack.c.b16 %v135, %v133
  %v154 = vpack.c.b16 %v138, %v136
  %v155 = vpack.c.b16 %v139, %v137
  %172 = vmatprep.subr.bf16.mxu0 %v141
  %173 = vmatpush1.bf16.msra.mxu0 %v140
  %174 = vmatprep.subr.bf16.mxu0 %v143
  %175 = vmatpush1.bf16.msra.mxu0 %v142
  %176 = vmatprep.subr.bf16.mxu0 %v145
  %177 = vmatpush1.bf16.msra.mxu0 %v144
  %178 = vmatprep.subr.bf16.mxu0 %v147
  %179 = vmatpush1.bf16.msra.mxu0 %v146
  %180 = vmatprep.subr.bf16.mxu0 %v149
  %181 = vmatpush1.bf16.msra.mxu0 %v148
  %182 = vmatprep.subr.bf16.mxu0 %v151
  %183 = vmatpush1.bf16.msra.mxu0 %v150
  %184 = vmatprep.subr.bf16.mxu0 %v153
  %185 = vmatpush1.bf16.msra.mxu0 %v152
  %186 = vmatprep.subr.bf16.mxu0 %v155
  %187 = vmatpush1.bf16.msra.mxu0 %v154
  %188 = vmatprep.subr.bf16.mxu0 0
  %189 = vmatpush1.bf16.msra.mxu0 0
  %190 = vmatprep.subr.bf16.mxu0 0
  %191 = vmatpush1.bf16.msra.mxu0 0
  %192 = vmatprep.subr.bf16.mxu0 0
  %193 = vmatpush1.bf16.msra.mxu0 0
  %194 = vmatprep.subr.bf16.mxu0 0
  %195 = vmatpush1.bf16.msra.mxu0 0
  %196 = vmatprep.subr.bf16.mxu0 0
  %197 = vmatpush1.bf16.msra.mxu0 0
  %198 = vmatprep.subr.bf16.mxu0 0
  %199 = vmatpush1.bf16.msra.mxu0 0
  %200 = vmatprep.subr.bf16.mxu0 0
  %201 = vmatpush1.bf16.msra.mxu0 0
  %202 = vmatprep.subr.bf16.mxu0 0
  %203 = vmatpush1.bf16.msra.mxu0 0
  %204 = vmatprep.mubr.bf16.mxu0 0
  %205 = vmatmul.mubr.bf16.gmra.mrb[0].mxu0 %v76
  %v206 = vpop.f32.mrb[0].mxu0
  %v207 = vadd.f32 0.0, %v206
  %v208 = vpop.f32.mrb[0].mxu0
  %v209 = vadd.f32 0.0, %v208
  %v210 = vpop.f32.mrb[0].mxu0
  %v211 = vadd.f32 0.0, %v210
  %v212 = vpop.f32.mrb[0].mxu0
  %v213 = vadd.f32 0.0, %v212
  %214 = vmatprep.mubr.bf16.mxu0 0
  %215 = vmatmul.mubr.bf16.gmra.mrb[0].mxu0 %v77
  %v216 = vpop.f32.mrb[0].mxu0
  %v217 = vadd.f32 0.0, %v216
  %v218 = vpop.f32.mrb[0].mxu0
  %v219 = vadd.f32 0.0, %v218
  %v220 = vpop.f32.mrb[0].mxu0
  %v221 = vadd.f32 0.0, %v220
  %v222 = vpop.f32.mrb[0].mxu0
  %v223 = vadd.f32 0.0, %v222
  %224 = vmatprep.mubr.bf16.mxu0 0
  %225 = vmatmul.mubr.bf16.gmra.mrb[0].mxu0 %v78
  %v226 = vpop.f32.mrb[0].mxu0
  %v227 = vadd.f32 0.0, %v226
  %v228 = vpop.f32.mrb[0].mxu0
  %v229 = vadd.f32 0.0, %v228
  %v230 = vpop.f32.mrb[0].mxu0
  %v231 = vadd.f32 0.0, %v230
  %v232 = vpop.f32.mrb[0].mxu0
  %v233 = vadd.f32 0.0, %v232
  %234 = vmatprep.mubr.bf16.mxu0 0
  %235 = vmatmul.mubr.bf16.gmra.mrb[0].mxu0 %v79
  %v236 = vpop.f32.mrb[0].mxu0
  %v237 = vadd.f32 0.0, %v236
  %v238 = vpop.f32.mrb[0].mxu0
  %v239 = vadd.f32 0.0, %v238
  %v240 = vpop.f32.mrb[0].mxu0
  %v241 = vadd.f32 0.0, %v240
  %v242 = vpop.f32.mrb[0].mxu0
  %v243 = vadd.f32 0.0, %v242
  %244 = vmatprep.mubr.bf16.mxu0 0
  %245 = vmatmul.mubr.bf16.gmra.mrb[0].mxu0 %v80
  %v246 = vpop.f32.mrb[0].mxu0
  %v247 = vadd.f32 0.0, %v246
  %v248 = vpop.f32.mrb[0].mxu0
  %v249 = vadd.f32 0.0, %v248
  %v250 = vpop.f32.mrb[0].mxu0
  %v251 = vadd.f32 0.0, %v250
  %v252 = vpop.f32.mrb[0].mxu0
  %v253 = vadd.f32 0.0, %v252
  %254 = vmatprep.mubr.bf16.mxu0 0
  %255 = vmatmul.mubr.bf16.gmra.mrb[0].mxu0 %v81
  %v256 = vpop.f32.mrb[0].mxu0
  %v257 = vadd.f32 0.0, %v256
  %v258 = vpop.f32.mrb[0].mxu0
  %v259 = vadd.f32 0.0, %v258
  %v260 = vpop.f32.mrb[0].mxu0
  %v261 = vadd.f32 0.0, %v260
  %v262 = vpop.f32.mrb[0].mxu0
  %v263 = vadd.f32 0.0, %v262
  %264 = vmatprep.mubr.bf16.mxu0 0
  %265 = vmatmul.mubr.bf16.gmra.mrb[0].mxu0 %v82
  %v266 = vpop.f32.mrb[0].mxu0
  %v267 = vadd.f32 0.0, %v266
  %v268 = vpop.f32.mrb[0].mxu0
  %v269 = vadd.f32 0.0, %v268
  %v270 = vpop.f32.mrb[0].mxu0
  %v271 = vadd.f32 0.0, %v270
  %v272 = vpop.f32.mrb[0].mxu0
  %v273 = vadd.f32 0.0, %v272
  %274 = vmatprep.mubr.bf16.mxu0 0
  %275 = vmatmul.mubr.bf16.gmra.mrb[0].mxu0 %v83
  %v276 = vpop.f32.mrb[0].mxu0
  %v277 = vadd.f32 0.0, %v276
  %v278 = vpop.f32.mrb[0].mxu0
  %v279 = vadd.f32 0.0, %v278
  %v280 = vpop.f32.mrb[0].mxu0
  %v281 = vadd.f32 0.0, %v280
  %v282 = vpop.f32.mrb[0].mxu0
  %v283 = vadd.f32 0.0, %v282
  %284 = vdwg.mxu0
  %v285 = vpack.c.bf16 %v211, %v207
  %v286 = vpack.c.bf16 %v213, %v209
  %v287 = vpack.c.bf16 %v221, %v217
  %v288 = vpack.c.bf16 %v223, %v219
  %v289 = vpack.c.bf16 %v231, %v227
  %v290 = vpack.c.bf16 %v233, %v229
  %v291 = vpack.c.bf16 %v241, %v237
  %v292 = vpack.c.bf16 %v243, %v239
  %v293 = vpack.c.bf16 %v251, %v247
  %v294 = vpack.c.bf16 %v253, %v249
  %v295 = vpack.c.bf16 %v261, %v257
  %v296 = vpack.c.bf16 %v263, %v259
  %v297 = vpack.c.bf16 %v271, %v267
  %v298 = vpack.c.bf16 %v273, %v269
  %v299 = vpack.c.bf16 %v281, %v277
  %v300 = vpack.c.bf16 %v283, %v279
  %v317 = vunpack.c.l.b16 %v285
  %v318 = vunpack.c.l.b16 %v286
  %v319 = vunpack.c.h.b16 %v285
  %v320 = vunpack.c.h.b16 %v286
  %v321 = vunpack.c.l.b16 %v287
  %v322 = vunpack.c.l.b16 %v288
  %v323 = vunpack.c.h.b16 %v287
  %v324 = vunpack.c.h.b16 %v288
  %v325 = vunpack.c.l.b16 %v289
  %v326 = vunpack.c.l.b16 %v290
  %v327 = vunpack.c.h.b16 %v289
  %v328 = vunpack.c.h.b16 %v290
  %v329 = vunpack.c.l.b16 %v291
  %v330 = vunpack.c.l.b16 %v292
  %v331 = vunpack.c.h.b16 %v291
  %v332 = vunpack.c.h.b16 %v292
  %v333 = vunpack.c.l.b16 %v293
  %v334 = vunpack.c.l.b16 %v294
  %v335 = vunpack.c.h.b16 %v293
  %v336 = vunpack.c.h.b16 %v294
  %v337 = vunpack.c.l.b16 %v295
  %v338 = vunpack.c.l.b16 %v296
  %v339 = vunpack.c.h.b16 %v295
  %v340 = vunpack.c.h.b16 %v296
  %v341 = vunpack.c.l.b16 %v297
  %v342 = vunpack.c.l.b16 %v298
  %v343 = vunpack.c.h.b16 %v297
  %v344 = vunpack.c.h.b16 %v298
  %v345 = vunpack.c.l.b16 %v299
  %v346 = vunpack.c.l.b16 %v300
  %v347 = vunpack.c.h.b16 %v299
  %v348 = vunpack.c.h.b16 %v300
  %v349 = vpack.c.b16 %v318, %v317
  %v350 = vpack.c.b16 %v320, %v319
  %v351 = vpack.c.b16 %v322, %v321
  %v352 = vpack.c.b16 %v324, %v323
  %v353 = vpack.c.b16 %v326, %v325
  %v354 = vpack.c.b16 %v328, %v327
  %v355 = vpack.c.b16 %v330, %v329
  %v356 = vpack.c.b16 %v332, %v331
  %v357 = vpack.c.b16 %v334, %v333
  %v358 = vpack.c.b16 %v336, %v335
  %v359 = vpack.c.b16 %v338, %v337
  %v360 = vpack.c.b16 %v340, %v339
  %v361 = vpack.c.b16 %v342, %v341
  %v362 = vpack.c.b16 %v344, %v343
  %v363 = vpack.c.b16 %v346, %v345
  %v364 = vpack.c.b16 %v348, %v347
  %381 = vst [vmem:[%s2] sm:$0xff] %v349
  %382 = vst [vmem:[%s2 + $0x8] sm:$0xff] %v350
  %383 = vst [vmem:[%s2 + $0x10] sm:$0xff] %v351
  %384 = vst [vmem:[%s2 + $0x18] sm:$0xff] %v352
  %385 = vst [vmem:[%s2 + $0x20] sm:$0xff] %v353
  %386 = vst [vmem:[%s2 + $0x28] sm:$0xff] %v354
  %387 = vst [vmem:[%s2 + $0x30] sm:$0xff] %v355
  %388 = vst [vmem:[%s2 + $0x38] sm:$0xff] %v356
  %389 = vst [vmem:[%s2 + $0x40] sm:$0xff] %v357
  %390 = vst [vmem:[%s2 + $0x48] sm:$0xff] %v358
  %391 = vst [vmem:[%s2 + $0x50] sm:$0xff] %v359
  %392 = vst [vmem:[%s2 + $0x58] sm:$0xff] %v360
  %393 = vst [vmem:[%s2 + $0x60] sm:$0xff] %v361
  %394 = vst [vmem:[%s2 + $0x68] sm:$0xff] %v362
  %395 = vst [vmem:[%s2 + $0x70] sm:$0xff] %v363
  %396 = vst [vmem:[%s2 + $0x78] sm:$0xff] %v364
  // Predicated region
  $region10: #{gcn_encoder_forward.3} parent=0 // pred_check
    _
  $region11: #{gcn_encoder_forward.3} parent=0 // pred_check_branch
    %398 = sbr.rel (0) target = $region13
  $region12: #{gcn_encoder_forward.3} parent=0 // pred_region
    _
  $region13: #{gcn_encoder_forward.3} parent=0 // pred_fallthru
    _
  // Predicated region
  $region14: #{gcn_encoder_forward.3} parent=0 // pred_check
    _
  $region15: #{gcn_encoder_forward.3} parent=0 // pred_check_branch
    %400 = sbr.rel (0) target = $region17
  $region16: #{gcn_encoder_forward.3} parent=0 // pred_region
    _
  $region17: #{gcn_encoder_forward.3} parent=0 // pred_fallthru
    _

// kernel: gcn_encoder_forward.5
$region0: #{gcn_encoder_forward.5}
  #allocation0 [shape = 'u32[]', space=smem, size = 0x4, offset = 0x4, fixed_abs, tag = 'smem constant byte address 0x4 - core index']
  #allocation1 [shape = 'u32[144,128]{1,0:T(1,128)}', space=vmem, size = 0x12000, scoped, tag = 'internal scratch']
  #allocation2 [shape = 'f32[128,256]{1,0:T(8,128)}', space=vmem, size = 0x20000, scoped, tag = 'scratch operand']
  %s0 = inlined_call_operand.vmem [shape: bf16[128,128], index: 0, kind: input, shape index: {}]
  %s1 = inlined_call_operand.vmem [shape: bf16[128,256], index: 1, kind: input, shape index: {}]
  %s2 = inlined_call_operand.vmem [shape: bf16[128,128], index: 2, kind: input, shape index: {}]
  %s3 = inlined_call_operand.vmem [shape: bf16[128,256], index: 3, kind: input, shape index: {}]
  %s4 = inlined_call_operand.vmem [shape: bf16[128,256], index: 4, kind: output, shape index: {}]
  %s5 = sld [smem:[#allocation0]]
  $region34: #{gcn_encoder_forward.5} parent=0
    _
  %s7 = ssub.s32 1, %s5
  %s8 = scalar_select 0, %s7, %s5
  // Predicated region
  $region2: #{gcn_encoder_forward.5} parent=0 // pred_check
    _
  $region3: #{gcn_encoder_forward.5} parent=0 // pred_check_branch
    %10 = sbr.rel (0) target = $region5
  $region4: #{gcn_encoder_forward.5} parent=0 // pred_region
    _
  $region5: #{gcn_encoder_forward.5} parent=0 // pred_fallthru
    _
  // Predicated region
  $region6: #{gcn_encoder_forward.5} parent=0 // pred_check
    _
  $region7: #{gcn_encoder_forward.5} parent=0 // pred_check_branch
    %12 = sbr.rel (0) target = $region9
  $region8: #{gcn_encoder_forward.5} parent=0 // pred_region
    _
  $region9: #{gcn_encoder_forward.5} parent=0 // pred_fallthru
    _
  // Predicated region
  $region10: #{gcn_encoder_forward.5} parent=0 // pred_check
    _
  $region11: #{gcn_encoder_forward.5} parent=0 // pred_check_branch
    %14 = sbr.rel (0) target = $region13
  $region12: #{gcn_encoder_forward.5} parent=0 // pred_region
    _
  $region13: #{gcn_encoder_forward.5} parent=0 // pred_fallthru
    _
  // Predicated region
  $region14: #{gcn_encoder_forward.5} parent=0 // pred_check
    _
  $region15: #{gcn_encoder_forward.5} parent=0 // pred_check_branch
    %16 = sbr.rel (0) target = $region17
  $region16: #{gcn_encoder_forward.5} parent=0 // pred_region
    _
  $region17: #{gcn_encoder_forward.5} parent=0 // pred_fallthru
    _
  %p18 = scmp.eq.s32.totalorder 0, 0
  // Predicated region
  $region18: #{gcn_encoder_forward.5} parent=0 // pred_check
    %p19 = pneg %p18
  $region19: #{gcn_encoder_forward.5} parent=0 // pred_check_branch
    %21 = sbr.rel (%p19) target = $region21
  $region20: #{gcn_encoder_forward.5} parent=0 // pred_region
    %v22 = vld [vmem:[%s2] sm:$0xf]
    %v23 = vld [vmem:[%s2 + $0x4] sm:$0xf]
    %v24 = vld [vmem:[%s2 + $0x8] sm:$0xf]
    %v25 = vld [vmem:[%s2 + $0xc] sm:$0xf]
    %v26 = vld [vmem:[%s2 + $0x10] sm:$0xf]
    %v27 = vld [vmem:[%s2 + $0x14] sm:$0xf]
    %v28 = vld [vmem:[%s2 + $0x18] sm:$0xf]
    %v29 = vld [vmem:[%s2 + $0x1c] sm:$0xf]
    %v30 = vld [vmem:[%s2 + $0x20] sm:$0xf]
    %v31 = vld [vmem:[%s2 + $0x24] sm:$0xf]
    %v32 = vld [vmem:[%s2 + $0x28] sm:$0xf]
    %v33 = vld [vmem:[%s2 + $0x2c] sm:$0xf]
    %v34 = vld [vmem:[%s2 + $0x30] sm:$0xf]
    %v35 = vld [vmem:[%s2 + $0x34] sm:$0xf]
    %v36 = vld [vmem:[%s2 + $0x38] sm:$0xf]
    %v37 = vld [vmem:[%s2 + $0x3c] sm:$0xf]
    %v38 = vld [vmem:[%s3] sm:$0xff]
    %v39 = vld [vmem:[%s3 + $0x8] sm:$0xff]
    %v40 = vld [vmem:[%s3 + $0x10] sm:$0xff]
    %v41 = vld [vmem:[%s3 + $0x18] sm:$0xff]
    %v42 = vld [vmem:[%s3 + $0x20] sm:$0xff]
    %v43 = vld [vmem:[%s3 + $0x28] sm:$0xff]
    %v44 = vld [vmem:[%s3 + $0x30] sm:$0xff]
    %v45 = vld [vmem:[%s3 + $0x38] sm:$0xff]
    %v46 = vld [vmem:[%s3 + $0x40] sm:$0xff]
    %v47 = vld [vmem:[%s3 + $0x48] sm:$0xff]
    %v48 = vld [vmem:[%s3 + $0x50] sm:$0xff]
    %v49 = vld [vmem:[%s3 + $0x58] sm:$0xff]
    %v50 = vld [vmem:[%s3 + $0x60] sm:$0xff]
    %v51 = vld [vmem:[%s3 + $0x68] sm:$0xff]
    %v52 = vld [vmem:[%s3 + $0x70] sm:$0xff]
    %v53 = vld [vmem:[%s3 + $0x78] sm:$0xff]
    %v70 = vunpack.c.l.b16 %v22
    %v71 = vunpack.c.l.b16 %v23
    %v72 = vunpack.c.l.b16 %v24
    %v73 = vunpack.c.l.b16 %v25
    %v74 = vunpack.c.l.b16 %v26
    %v75 = vunpack.c.l.b16 %v27
    %v76 = vunpack.c.l.b16 %v28
    %v77 = vunpack.c.l.b16 %v29
    %v78 = vunpack.c.l.b16 %v30
    %v79 = vunpack.c.l.b16 %v31
    %v80 = vunpack.c.l.b16 %v32
    %v81 = vunpack.c.l.b16 %v33
    %v82 = vunpack.c.l.b16 %v34
    %v83 = vunpack.c.l.b16 %v35
    %v84 = vunpack.c.l.b16 %v36
    %v85 = vunpack.c.l.b16 %v37
    %v86 = vpack.c.b16 %v71, %v70
    %v87 = vpack.c.b16 %v73, %v72
    %v88 = vpack.c.b16 %v75, %v74
    %v89 = vpack.c.b16 %v77, %v76
    %v90 = vpack.c.b16 %v79, %v78
    %v91 = vpack.c.b16 %v81, %v80
    %v92 = vpack.c.b16 %v83, %v82
    %v93 = vpack.c.b16 %v85, %v84
    %v118 = vunpack.c.l.b16 %v38
    %v119 = vunpack.c.h.b16 %v38
    %v120 = vunpack.c.l.b16 %v39
    %v121 = vunpack.c.h.b16 %v39
    %v122 = vunpack.c.l.b16 %v40
    %v123 = vunpack.c.h.b16 %v40
    %v124 = vunpack.c.l.b16 %v41
    %v125 = vunpack.c.h.b16 %v41
    %v126 = vunpack.c.l.b16 %v42
    %v127 = vunpack.c.h.b16 %v42
    %v128 = vunpack.c.l.b16 %v43
    %v129 = vunpack.c.h.b16 %v43
    %v130 = vunpack.c.l.b16 %v44
    %v131 = vunpack.c.h.b16 %v44
    %v132 = vunpack.c.l.b16 %v45
    %v133 = vunpack.c.h.b16 %v45
    %v134 = vunpack.c.l.b16 %v46
    %v135 = vunpack.c.h.b16 %v46
    %v136 = vunpack.c.l.b16 %v47
    %v137 = vunpack.c.h.b16 %v47
    %v138 = vunpack.c.l.b16 %v48
    %v139 = vunpack.c.h.b16 %v48
    %v140 = vunpack.c.l.b16 %v49
    %v141 = vunpack.c.h.b16 %v49
    %v142 = vunpack.c.l.b16 %v50
    %v143 = vunpack.c.h.b16 %v50
    %v144 = vunpack.c.l.b16 %v51
    %v145 = vunpack.c.h.b16 %v51
    %v146 = vunpack.c.l.b16 %v52
    %v147 = vunpack.c.h.b16 %v52
    %v148 = vunpack.c.l.b16 %v53
    %v149 = vunpack.c.h.b16 %v53
    %v150 = vpack.c.b16 %v120, %v118
    %v151 = vpack.c.b16 %v121, %v119
    %v152 = vpack.c.b16 %v124, %v122
    %v153 = vpack.c.b16 %v125, %v123
    %v154 = vpack.c.b16 %v128, %v126
    %v155 = vpack.c.b16 %v129, %v127
    %v156 = vpack.c.b16 %v132, %v130
    %v157 = vpack.c.b16 %v133, %v131
    %v158 = vpack.c.b16 %v136, %v134
    %v159 = vpack.c.b16 %v137, %v135
    %v160 = vpack.c.b16 %v140, %v138
    %v161 = vpack.c.b16 %v141, %v139
    %v162 = vpack.c.b16 %v144, %v142
    %v163 = vpack.c.b16 %v145, %v143
    %v164 = vpack.c.b16 %v148, %v146
    %v165 = vpack.c.b16 %v149, %v147
    %182 = vmatprep.subr.bf16.mxu0 %v151
    %183 = vmatpush1.bf16.msra.mxu0 %v150
    %184 = vmatprep.subr.bf16.mxu0 %v153
    %185 = vmatpush1.bf16.msra.mxu0 %v152
    %186 = vmatprep.subr.bf16.mxu0 %v155
    %187 = vmatpush1.bf16.msra.mxu0 %v154
    %188 = vmatprep.subr.bf16.mxu0 %v157
    %189 = vmatpush1.bf16.msra.mxu0 %v156
    %190 = vmatprep.subr.bf16.mxu0 %v159
    %191 = vmatpush1.bf16.msra.mxu0 %v158
    %192 = vmatprep.subr.bf16.mxu0 %v161
    %193 = vmatpush1.bf16.msra.mxu0 %v160
    %194 = vmatprep.subr.bf16.mxu0 %v163
    %195 = vmatpush1.bf16.msra.mxu0 %v162
    %196 = vmatprep.subr.bf16.mxu0 %v165
    %197 = vmatpush1.bf16.msra.mxu0 %v164
    %198 = vmatprep.subr.bf16.mxu0 0
    %199 = vmatpush1.bf16.msra.mxu0 0
    %200 = vmatprep.subr.bf16.mxu0 0
    %201 = vmatpush1.bf16.msra.mxu0 0
    %202 = vmatprep.subr.bf16.mxu0 0
    %203 = vmatpush1.bf16.msra.mxu0 0
    %204 = vmatprep.subr.bf16.mxu0 0
    %205 = vmatpush1.bf16.msra.mxu0 0
    %206 = vmatprep.subr.bf16.mxu0 0
    %207 = vmatpush1.bf16.msra.mxu0 0
    %208 = vmatprep.subr.bf16.mxu0 0
    %209 = vmatpush1.bf16.msra.mxu0 0
    %210 = vmatprep.subr.bf16.mxu0 0
    %211 = vmatpush1.bf16.msra.mxu0 0
    %212 = vmatprep.subr.bf16.mxu0 0
    %213 = vmatpush1.bf16.msra.mxu0 0
    %214 = vmatprep.mubr.bf16.mxu0 0
    %215 = vmatmul.mubr.bf16.gmra.mrb[0].mxu0 %v86
    %v216 = vpop.f32.mrb[0].mxu0
    %v217 = vadd.f32 0.0, %v216
    %v218 = vpop.f32.mrb[0].mxu0
    %v219 = vadd.f32 0.0, %v218
    %v220 = vpop.f32.mrb[0].mxu0
    %v221 = vadd.f32 0.0, %v220
    %v222 = vpop.f32.mrb[0].mxu0
    %v223 = vadd.f32 0.0, %v222
    %224 = vmatprep.mubr.bf16.mxu0 0
    %225 = vmatmul.mubr.bf16.gmra.mrb[0].mxu0 %v87
    %v226 = vpop.f32.mrb[0].mxu0
    %v227 = vadd.f32 0.0, %v226
    %v228 = vpop.f32.mrb[0].mxu0
    %v229 = vadd.f32 0.0, %v228
    %v230 = vpop.f32.mrb[0].mxu0
    %v231 = vadd.f32 0.0, %v230
    %v232 = vpop.f32.mrb[0].mxu0
    %v233 = vadd.f32 0.0, %v232
    %234 = vmatprep.mubr.bf16.mxu0 0
    %235 = vmatmul.mubr.bf16.gmra.mrb[0].mxu0 %v88
    %v236 = vpop.f32.mrb[0].mxu0
    %v237 = vadd.f32 0.0, %v236
    %v238 = vpop.f32.mrb[0].mxu0
    %v239 = vadd.f32 0.0, %v238
    %v240 = vpop.f32.mrb[0].mxu0
    %v241 = vadd.f32 0.0, %v240
    %v242 = vpop.f32.mrb[0].mxu0
    %v243 = vadd.f32 0.0, %v242
    %244 = vmatprep.mubr.bf16.mxu0 0
    %245 = vmatmul.mubr.bf16.gmra.mrb[0].mxu0 %v89
    %v246 = vpop.f32.mrb[0].mxu0
    %v247 = vadd.f32 0.0, %v246
    %v248 = vpop.f32.mrb[0].mxu0
    %v249 = vadd.f32 0.0, %v248
    %v250 = vpop.f32.mrb[0].mxu0
    %v251 = vadd.f32 0.0, %v250
    %v252 = vpop.f32.mrb[0].mxu0
    %v253 = vadd.f32 0.0, %v252
    %254 = vmatprep.mubr.bf16.mxu0 0
    %255 = vmatmul.mubr.bf16.gmra.mrb[0].mxu0 %v90
    %v256 = vpop.f32.mrb[0].mxu0
    %v257 = vadd.f32 0.0, %v256
    %v258 = vpop.f32.mrb[0].mxu0
    %v259 = vadd.f32 0.0, %v258
    %v260 = vpop.f32.mrb[0].mxu0
    %v261 = vadd.f32 0.0, %v260
    %v262 = vpop.f32.mrb[0].mxu0
    %v263 = vadd.f32 0.0, %v262
    %264 = vmatprep.mubr.bf16.mxu0 0
    %265 = vmatmul.mubr.bf16.gmra.mrb[0].mxu0 %v91
    %v266 = vpop.f32.mrb[0].mxu0
    %v267 = vadd.f32 0.0, %v266
    %v268 = vpop.f32.mrb[0].mxu0
    %v269 = vadd.f32 0.0, %v268
    %v270 = vpop.f32.mrb[0].mxu0
    %v271 = vadd.f32 0.0, %v270
    %v272 = vpop.f32.mrb[0].mxu0
    %v273 = vadd.f32 0.0, %v272
    %274 = vmatprep.mubr.bf16.mxu0 0
    %275 = vmatmul.mubr.bf16.gmra.mrb[0].mxu0 %v92
    %v276 = vpop.f32.mrb[0].mxu0
    %v277 = vadd.f32 0.0, %v276
    %v278 = vpop.f32.mrb[0].mxu0
    %v279 = vadd.f32 0.0, %v278
    %v280 = vpop.f32.mrb[0].mxu0
    %v281 = vadd.f32 0.0, %v280
    %v282 = vpop.f32.mrb[0].mxu0
    %v283 = vadd.f32 0.0, %v282
    %284 = vmatprep.mubr.bf16.mxu0 0
    %285 = vmatmul.mubr.bf16.gmra.mrb[0].mxu0 %v93
    %v286 = vpop.f32.mrb[0].mxu0
    %v287 = vadd.f32 0.0, %v286
    %v288 = vpop.f32.mrb[0].mxu0
    %v289 = vadd.f32 0.0, %v288
    %v290 = vpop.f32.mrb[0].mxu0
    %v291 = vadd.f32 0.0, %v290
    %v292 = vpop.f32.mrb[0].mxu0
    %v293 = vadd.f32 0.0, %v292
    %294 = vdwg.mxu0
    %295 = vst [vmem:[#allocation2] sm:$0xff] %v217
    %296 = vst [vmem:[#allocation2 + $0x8] sm:$0xff] %v219
    %297 = vst [vmem:[#allocation2 + $0x10] sm:$0xff] %v221
    %298 = vst [vmem:[#allocation2 + $0x18] sm:$0xff] %v223
    %299 = vst [vmem:[#allocation2 + $0x20] sm:$0xff] %v227
    %300 = vst [vmem:[#allocation2 + $0x28] sm:$0xff] %v229
    %301 = vst [vmem:[#allocation2 + $0x30] sm:$0xff] %v231
    %302 = vst [vmem:[#allocation2 + $0x38] sm:$0xff] %v233
    %303 = vst [vmem:[#allocation2 + $0x40] sm:$0xff] %v237
    %304 = vst [vmem:[#allocation2 + $0x48] sm:$0xff] %v239
    %305 = vst [vmem:[#allocation2 + $0x50] sm:$0xff] %v241
    %306 = vst [vmem:[#allocation2 + $0x58] sm:$0xff] %v243
    %307 = vst [vmem:[#allocation2 + $0x60] sm:$0xff] %v247
    %308 = vst [vmem:[#allocation2 + $0x68] sm:$0xff] %v249
    %309 = vst [vmem:[#allocation2 + $0x70] sm:$0xff] %v251
    %310 = vst [vmem:[#allocation2 + $0x78] sm:$0xff] %v253
    %311 = vst [vmem:[#allocation2 + $0x80] sm:$0xff] %v257
    %312 = vst [vmem:[#allocation2 + $0x88] sm:$0xff] %v259
    %313 = vst [vmem:[#allocation2 + $0x90] sm:$0xff] %v261
    %314 = vst [vmem:[#allocation2 + $0x98] sm:$0xff] %v263
    %315 = vst [vmem:[#allocation2 + $0xa0] sm:$0xff] %v267
    %316 = vst [vmem:[#allocation2 + $0xa8] sm:$0xff] %v269
    %317 = vst [vmem:[#allocation2 + $0xb0] sm:$0xff] %v271
    %318 = vst [vmem:[#allocation2 + $0xb8] sm:$0xff] %v273
    %319 = vst [vmem:[#allocation2 + $0xc0] sm:$0xff] %v277
    %320 = vst [vmem:[#allocation2 + $0xc8] sm:$0xff] %v279
    %321 = vst [vmem:[#allocation2 + $0xd0] sm:$0xff] %v281
    %322 = vst [vmem:[#allocation2 + $0xd8] sm:$0xff] %v283
    %323 = vst [vmem:[#allocation2 + $0xe0] sm:$0xff] %v287
    %324 = vst [vmem:[#allocation2 + $0xe8] sm:$0xff] %v289
    %325 = vst [vmem:[#allocation2 + $0xf0] sm:$0xff] %v291
    %326 = vst [vmem:[#allocation2 + $0xf8] sm:$0xff] %v293
  $region21: #{gcn_encoder_forward.5} parent=0 // pred_fallthru
    _
  %v327 = vld [vmem:[#allocation2] sm:$0xff]
  %v328 = vld [vmem:[#allocation2 + $0x8] sm:$0xff]
  %v329 = vld [vmem:[#allocation2 + $0x10] sm:$0xff]
  %v330 = vld [vmem:[#allocation2 + $0x18] sm:$0xff]
  %v331 = vld [vmem:[#allocation2 + $0x20] sm:$0xff]
  %v332 = vld [vmem:[#allocation2 + $0x28] sm:$0xff]
  %v333 = vld [vmem:[#allocation2 + $0x30] sm:$0xff]
  %v334 = vld [vmem:[#allocation2 + $0x38] sm:$0xff]
  %v335 = vld [vmem:[#allocation2 + $0x40] sm:$0xff]
  %v336 = vld [vmem:[#allocation2 + $0x48] sm:$0xff]
  %v337 = vld [vmem:[#allocation2 + $0x50] sm:$0xff]
  %v338 = vld [vmem:[#allocation2 + $0x58] sm:$0xff]
  %v339 = vld [vmem:[#allocation2 + $0x60] sm:$0xff]
  %v340 = vld [vmem:[#allocation2 + $0x68] sm:$0xff]
  %v341 = vld [vmem:[#allocation2 + $0x70] sm:$0xff]
  %v342 = vld [vmem:[#allocation2 + $0x78] sm:$0xff]
  %v343 = vld [vmem:[#allocation2 + $0x80] sm:$0xff]
  %v344 = vld [vmem:[#allocation2 + $0x88] sm:$0xff]
  %v345 = vld [vmem:[#allocation2 + $0x90] sm:$0xff]
  %v346 = vld [vmem:[#allocation2 + $0x98] sm:$0xff]
  %v347 = vld [vmem:[#allocation2 + $0xa0] sm:$0xff]
  %v348 = vld [vmem:[#allocation2 + $0xa8] sm:$0xff]
  %v349 = vld [vmem:[#allocation2 + $0xb0] sm:$0xff]
  %v350 = vld [vmem:[#allocation2 + $0xb8] sm:$0xff]
  %v351 = vld [vmem:[#allocation2 + $0xc0] sm:$0xff]
  %v352 = vld [vmem:[#allocation2 + $0xc8] sm:$0xff]
  %v353 = vld [vmem:[#allocation2 + $0xd0] sm:$0xff]
  %v354 = vld [vmem:[#allocation2 + $0xd8] sm:$0xff]
  %v355 = vld [vmem:[#allocation2 + $0xe0] sm:$0xff]
  %v356 = vld [vmem:[#allocation2 + $0xe8] sm:$0xff]
  %v357 = vld [vmem:[#allocation2 + $0xf0] sm:$0xff]
  %v358 = vld [vmem:[#allocation2 + $0xf8] sm:$0xff]
  %v359 = vld [vmem:[%s0] sm:$0xf]
  %v360 = vld [vmem:[%s0 + $0x4] sm:$0xf]
  %v361 = vld [vmem:[%s0 + $0x8] sm:$0xf]
  %v362 = vld [vmem:[%s0 + $0xc] sm:$0xf]
  %v363 = vld [vmem:[%s0 + $0x10] sm:$0xf]
  %v364 = vld [vmem:[%s0 + $0x14] sm:$0xf]
  %v365 = vld [vmem:[%s0 + $0x18] sm:$0xf]
  %v366 = vld [vmem:[%s0 + $0x1c] sm:$0xf]
  %v367 = vld [vmem:[%s0 + $0x20] sm:$0xf]
  %v368 = vld [vmem:[%s0 + $0x24] sm:$0xf]
  %v369 = vld [vmem:[%s0 + $0x28] sm:$0xf]
  %v370 = vld [vmem:[%s0 + $0x2c] sm:$0xf]
  %v371 = vld [vmem:[%s0 + $0x30] sm:$0xf]
  %v372 = vld [vmem:[%s0 + $0x34] sm:$0xf]
  %v373 = vld [vmem:[%s0 + $0x38] sm:$0xf]
  %v374 = vld [vmem:[%s0 + $0x3c] sm:$0xf]
  %v375 = vld [vmem:[%s1] sm:$0xff]
  %v376 = vld [vmem:[%s1 + $0x8] sm:$0xff]
  %v377 = vld [vmem:[%s1 + $0x10] sm:$0xff]
  %v378 = vld [vmem:[%s1 + $0x18] sm:$0xff]
  %v379 = vld [vmem:[%s1 + $0x20] sm:$0xff]
  %v380 = vld [vmem:[%s1 + $0x28] sm:$0xff]
  %v381 = vld [vmem:[%s1 + $0x30] sm:$0xff]
  %v382 = vld [vmem:[%s1 + $0x38] sm:$0xff]
  %v383 = vld [vmem:[%s1 + $0x40] sm:$0xff]
  %v384 = vld [vmem:[%s1 + $0x48] sm:$0xff]
  %v385 = vld [vmem:[%s1 + $0x50] sm:$0xff]
  %v386 = vld [vmem:[%s1 + $0x58] sm:$0xff]
  %v387 = vld [vmem:[%s1 + $0x60] sm:$0xff]
  %v388 = vld [vmem:[%s1 + $0x68] sm:$0xff]
  %v389 = vld [vmem:[%s1 + $0x70] sm:$0xff]
  %v390 = vld [vmem:[%s1 + $0x78] sm:$0xff]
  %v407 = vunpack.c.l.b16 %v359
  %v408 = vunpack.c.l.b16 %v360
  %v409 = vunpack.c.l.b16 %v361
  %v410 = vunpack.c.l.b16 %v362
  %v411 = vunpack.c.l.b16 %v363
  %v412 = vunpack.c.l.b16 %v364
  %v413 = vunpack.c.l.b16 %v365
  %v414 = vunpack.c.l.b16 %v366
  %v415 = vunpack.c.l.b16 %v367
  %v416 = vunpack.c.l.b16 %v368
  %v417 = vunpack.c.l.b16 %v369
  %v418 = vunpack.c.l.b16 %v370
  %v419 = vunpack.c.l.b16 %v371
  %v420 = vunpack.c.l.b16 %v372
  %v421 = vunpack.c.l.b16 %v373
  %v422 = vunpack.c.l.b16 %v374
  %v423 = vpack.c.b16 %v408, %v407
  %v424 = vpack.c.b16 %v410, %v409
  %v425 = vpack.c.b16 %v412, %v411
  %v426 = vpack.c.b16 %v414, %v413
  %v427 = vpack.c.b16 %v416, %v415
  %v428 = vpack.c.b16 %v418, %v417
  %v429 = vpack.c.b16 %v420, %v419
  %v430 = vpack.c.b16 %v422, %v421
  %v455 = vunpack.c.l.b16 %v375
  %v456 = vunpack.c.h.b16 %v375
  %v457 = vunpack.c.l.b16 %v376
  %v458 = vunpack.c.h.b16 %v376
  %v459 = vunpack.c.l.b16 %v377
  %v460 = vunpack.c.h.b16 %v377
  %v461 = vunpack.c.l.b16 %v378
  %v462 = vunpack.c.h.b16 %v378
  %v463 = vunpack.c.l.b16 %v379
  %v464 = vunpack.c.h.b16 %v379
  %v465 = vunpack.c.l.b16 %v380
  %v466 = vunpack.c.h.b16 %v380
  %v467 = vunpack.c.l.b16 %v381
  %v468 = vunpack.c.h.b16 %v381
  %v469 = vunpack.c.l.b16 %v382
  %v470 = vunpack.c.h.b16 %v382
  %v471 = vunpack.c.l.b16 %v383
  %v472 = vunpack.c.h.b16 %v383
  %v473 = vunpack.c.l.b16 %v384
  %v474 = vunpack.c.h.b16 %v384
  %v475 = vunpack.c.l.b16 %v385
  %v476 = vunpack.c.h.b16 %v385
  %v477 = vunpack.c.l.b16 %v386
  %v478 = vunpack.c.h.b16 %v386
  %v479 = vunpack.c.l.b16 %v387
  %v480 = vunpack.c.h.b16 %v387
  %v481 = vunpack.c.l.b16 %v388
  %v482 = vunpack.c.h.b16 %v388
  %v483 = vunpack.c.l.b16 %v389
  %v484 = vunpack.c.h.b16 %v389
  %v485 = vunpack.c.l.b16 %v390
  %v486 = vunpack.c.h.b16 %v390
  %v487 = vpack.c.b16 %v457, %v455
  %v488 = vpack.c.b16 %v458, %v456
  %v489 = vpack.c.b16 %v461, %v459
  %v490 = vpack.c.b16 %v462, %v460
  %v491 = vpack.c.b16 %v465, %v463
  %v492 = vpack.c.b16 %v466, %v464
  %v493 = vpack.c.b16 %v469, %v467
  %v494 = vpack.c.b16 %v470, %v468
  %v495 = vpack.c.b16 %v473, %v471
  %v496 = vpack.c.b16 %v474, %v472
  %v497 = vpack.c.b16 %v477, %v475
  %v498 = vpack.c.b16 %v478, %v476
  %v499 = vpack.c.b16 %v481, %v479
  %v500 = vpack.c.b16 %v482, %v480
  %v501 = vpack.c.b16 %v485, %v483
  %v502 = vpack.c.b16 %v486, %v484
  %519 = vmatprep.subr.bf16.mxu0 %v488
  %520 = vmatpush1.bf16.msra.mxu0 %v487
  %521 = vmatprep.subr.bf16.mxu0 %v490
  %522 = vmatpush1.bf16.msra.mxu0 %v489
  %523 = vmatprep.subr.bf16.mxu0 %v492
  %524 = vmatpush1.bf16.msra.mxu0 %v491
  %525 = vmatprep.subr.bf16.mxu0 %v494
  %526 = vmatpush1.bf16.msra.mxu0 %v493
  %527 = vmatprep.subr.bf16.mxu0 %v496
  %528 = vmatpush1.bf16.msra.mxu0 %v495
  %529 = vmatprep.subr.bf16.mxu0 %v498
  %530 = vmatpush1.bf16.msra.mxu0 %v497
  %531 = vmatprep.subr.bf16.mxu0 %v500
  %532 = vmatpush1.bf16.msra.mxu0 %v499
  %533 = vmatprep.subr.bf16.mxu0 %v502
  %534 = vmatpush1.bf16.msra.mxu0 %v501
  %535 = vmatprep.subr.bf16.mxu0 0
  %536 = vmatpush1.bf16.msra.mxu0 0
  %537 = vmatprep.subr.bf16.mxu0 0
  %538 = vmatpush1.bf16.msra.mxu0 0
  %539 = vmatprep.subr.bf16.mxu0 0
  %540 = vmatpush1.bf16.msra.mxu0 0
  %541 = vmatprep.subr.bf16.mxu0 0
  %542 = vmatpush1.bf16.msra.mxu0 0
  %543 = vmatprep.subr.bf16.mxu0 0
  %544 = vmatpush1.bf16.msra.mxu0 0
  %545 = vmatprep.subr.bf16.mxu0 0
  %546 = vmatpush1.bf16.msra.mxu0 0
  %547 = vmatprep.subr.bf16.mxu0 0
  %548 = vmatpush1.bf16.msra.mxu0 0
  %549 = vmatprep.subr.bf16.mxu0 0
  %550 = vmatpush1.bf16.msra.mxu0 0
  %551 = vmatprep.mubr.bf16.mxu0 0
  %552 = vmatmul.mubr.bf16.gmra.mrb[0].mxu0 %v423
  %v553 = vpop.f32.mrb[0].mxu0
  %v554 = vadd.f32 0.0, %v553
  %v555 = vpop.f32.mrb[0].mxu0
  %v556 = vadd.f32 0.0, %v555
  %v557 = vpop.f32.mrb[0].mxu0
  %v558 = vadd.f32 0.0, %v557
  %v559 = vpop.f32.mrb[0].mxu0
  %v560 = vadd.f32 0.0, %v559
  %561 = vmatprep.mubr.bf16.mxu0 0
  %562 = vmatmul.mubr.bf16.gmra.mrb[0].mxu0 %v424
  %v563 = vpop.f32.mrb[0].mxu0
  %v564 = vadd.f32 0.0, %v563
  %v565 = vpop.f32.mrb[0].mxu0
  %v566 = vadd.f32 0.0, %v565
  %v567 = vpop.f32.mrb[0].mxu0
  %v568 = vadd.f32 0.0, %v567
  %v569 = vpop.f32.mrb[0].mxu0
  %v570 = vadd.f32 0.0, %v569
  %571 = vmatprep.mubr.bf16.mxu0 0
  %572 = vmatmul.mubr.bf16.gmra.mrb[0].mxu0 %v425
  %v573 = vpop.f32.mrb[0].mxu0
  %v574 = vadd.f32 0.0, %v573
  %v575 = vpop.f32.mrb[0].mxu0
  %v576 = vadd.f32 0.0, %v575
  %v577 = vpop.f32.mrb[0].mxu0
  %v578 = vadd.f32 0.0, %v577
  %v579 = vpop.f32.mrb[0].mxu0
  %v580 = vadd.f32 0.0, %v579
  %581 = vmatprep.mubr.bf16.mxu0 0
  %582 = vmatmul.mubr.bf16.gmra.mrb[0].mxu0 %v426
  %v583 = vpop.f32.mrb[0].mxu0
  %v584 = vadd.f32 0.0, %v583
  %v585 = vpop.f32.mrb[0].mxu0
  %v586 = vadd.f32 0.0, %v585
  %v587 = vpop.f32.mrb[0].mxu0
  %v588 = vadd.f32 0.0, %v587
  %v589 = vpop.f32.mrb[0].mxu0
  %v590 = vadd.f32 0.0, %v589
  %591 = vmatprep.mubr.bf16.mxu0 0
  %592 = vmatmul.mubr.bf16.gmra.mrb[0].mxu0 %v427
  %v593 = vpop.f32.mrb[0].mxu0
  %v594 = vadd.f32 0.0, %v593
  %v595 = vpop.f32.mrb[0].mxu0
  %v596 = vadd.f32 0.0, %v595
  %v597 = vpop.f32.mrb[0].mxu0
  %v598 = vadd.f32 0.0, %v597
  %v599 = vpop.f32.mrb[0].mxu0
  %v600 = vadd.f32 0.0, %v599
  %601 = vmatprep.mubr.bf16.mxu0 0
  %602 = vmatmul.mubr.bf16.gmra.mrb[0].mxu0 %v428
  %v603 = vpop.f32.mrb[0].mxu0
  %v604 = vadd.f32 0.0, %v603
  %v605 = vpop.f32.mrb[0].mxu0
  %v606 = vadd.f32 0.0, %v605
  %v607 = vpop.f32.mrb[0].mxu0
  %v608 = vadd.f32 0.0, %v607
  %v609 = vpop.f32.mrb[0].mxu0
  %v610 = vadd.f32 0.0, %v609
  %611 = vmatprep.mubr.bf16.mxu0 0
  %612 = vmatmul.mubr.bf16.gmra.mrb[0].mxu0 %v429
  %v613 = vpop.f32.mrb[0].mxu0
  %v614 = vadd.f32 0.0, %v613
  %v615 = vpop.f32.mrb[0].mxu0
  %v616 = vadd.f32 0.0, %v615
  %v617 = vpop.f32.mrb[0].mxu0
  %v618 = vadd.f32 0.0, %v617
  %v619 = vpop.f32.mrb[0].mxu0
  %v620 = vadd.f32 0.0, %v619
  %621 = vmatprep.mubr.bf16.mxu0 0
  %622 = vmatmul.mubr.bf16.gmra.mrb[0].mxu0 %v430
  %v623 = vpop.f32.mrb[0].mxu0
  %v624 = vadd.f32 0.0, %v623
  %v625 = vpop.f32.mrb[0].mxu0
  %v626 = vadd.f32 0.0, %v625
  %v627 = vpop.f32.mrb[0].mxu0
  %v628 = vadd.f32 0.0, %v627
  %v629 = vpop.f32.mrb[0].mxu0
  %v630 = vadd.f32 0.0, %v629
  %631 = vdwg.mxu0
  %v632 = vadd.f32 %v327, %v554
  %v633 = vadd.f32 %v328, %v556
  %v634 = vadd.f32 %v329, %v558
  %v635 = vadd.f32 %v330, %v560
  %v636 = vadd.f32 %v331, %v564
  %v637 = vadd.f32 %v332, %v566
  %v638 = vadd.f32 %v333, %v568
  %v639 = vadd.f32 %v334, %v570
  %v640 = vadd.f32 %v335, %v574
  %v641 = vadd.f32 %v336, %v576
  %v642 = vadd.f32 %v337, %v578
  %v643 = vadd.f32 %v338, %v580
  %v644 = vadd.f32 %v339, %v584
  %v645 = vadd.f32 %v340, %v586
  %v646 = vadd.f32 %v341, %v588
  %v647 = vadd.f32 %v342, %v590
  %v648 = vadd.f32 %v343, %v594
  %v649 = vadd.f32 %v344, %v596
  %v650 = vadd.f32 %v345, %v598
  %v651 = vadd.f32 %v346, %v600
  %v652 = vadd.f32 %v347, %v604
  %v653 = vadd.f32 %v348, %v606
  %v654 = vadd.f32 %v349, %v608
  %v655 = vadd.f32 %v350, %v610
  %v656 = vadd.f32 %v351, %v614
  %v657 = vadd.f32 %v352, %v616
  %v658 = vadd.f32 %v353, %v618
  %v659 = vadd.f32 %v354, %v620
  %v660 = vadd.f32 %v355, %v624
  %v661 = vadd.f32 %v356, %v626
  %v662 = vadd.f32 %v357, %v628
  %v663 = vadd.f32 %v358, %v630
  %664 = vst [vmem:[#allocation2] sm:$0xff] %v632
  %665 = vst [vmem:[#allocation2 + $0x8] sm:$0xff] %v633
  %666 = vst [vmem:[#allocation2 + $0x10] sm:$0xff] %v634
  %667 = vst [vmem:[#allocation2 + $0x18] sm:$0xff] %v635
  %668 = vst [vmem:[#allocation2 + $0x20] sm:$0xff] %v636
  %669 = vst [vmem:[#allocation2 + $0x28] sm:$0xff] %v637
  %670 = vst [vmem:[#allocation2 + $0x30] sm:$0xff] %v638
  %671 = vst [vmem:[#allocation2 + $0x38] sm:$0xff] %v639
  %672 = vst [vmem:[#allocation2 + $0x40] sm:$0xff] %v640
  %673 = vst [vmem:[#allocation2 + $0x48] sm:$0xff] %v641
  %674 = vst [vmem:[#allocation2 + $0x50] sm:$0xff] %v642
  %675 = vst [vmem:[#allocation2 + $0x58] sm:$0xff] %v643
  %676 = vst [vmem:[#allocation2 + $0x60] sm:$0xff] %v644
  %677 = vst [vmem:[#allocation2 + $0x68] sm:$0xff] %v645
  %678 = vst [vmem:[#allocation2 + $0x70] sm:$0xff] %v646
  %679 = vst [vmem:[#allocation2 + $0x78] sm:$0xff] %v647
  %680 = vst [vmem:[#allocation2 + $0x80] sm:$0xff] %v648
  %681 = vst [vmem:[#allocation2 + $0x88] sm:$0xff] %v649
  %682 = vst [vmem:[#allocation2 + $0x90] sm:$0xff] %v650
  %683 = vst [vmem:[#allocation2 + $0x98] sm:$0xff] %v651
  %684 = vst [vmem:[#allocation2 + $0xa0] sm:$0xff] %v652
  %685 = vst [vmem:[#allocation2 + $0xa8] sm:$0xff] %v653
  %686 = vst [vmem:[#allocation2 + $0xb0] sm:$0xff] %v654
  %687 = vst [vmem:[#allocation2 + $0xb8] sm:$0xff] %v655
  %688 = vst [vmem:[#allocation2 + $0xc0] sm:$0xff] %v656
  %689 = vst [vmem:[#allocation2 + $0xc8] sm:$0xff] %v657
  %690 = vst [vmem:[#allocation2 + $0xd0] sm:$0xff] %v658
  %691 = vst [vmem:[#allocation2 + $0xd8] sm:$0xff] %v659
  %692 = vst [vmem:[#allocation2 + $0xe0] sm:$0xff] %v660
  %693 = vst [vmem:[#allocation2 + $0xe8] sm:$0xff] %v661
  %694 = vst [vmem:[#allocation2 + $0xf0] sm:$0xff] %v662
  %695 = vst [vmem:[#allocation2 + $0xf8] sm:$0xff] %v663
  // Predicated region
  $region22: #{gcn_encoder_forward.5} parent=0 // pred_check
    %p696 = pneg %p18
  $region23: #{gcn_encoder_forward.5} parent=0 // pred_check_branch
    %698 = sbr.rel (%p696) target = $region25
  $region24: #{gcn_encoder_forward.5} parent=0 // pred_region
    %v699 = vld [vmem:[#allocation2] sm:$0xff]
    %v700 = vld [vmem:[#allocation2 + $0x8] sm:$0xff]
    %v701 = vld [vmem:[#allocation2 + $0x10] sm:$0xff]
    %v702 = vld [vmem:[#allocation2 + $0x18] sm:$0xff]
    %v703 = vld [vmem:[#allocation2 + $0x20] sm:$0xff]
    %v704 = vld [vmem:[#allocation2 + $0x28] sm:$0xff]
    %v705 = vld [vmem:[#allocation2 + $0x30] sm:$0xff]
    %v706 = vld [vmem:[#allocation2 + $0x38] sm:$0xff]
    %v707 = vld [vmem:[#allocation2 + $0x40] sm:$0xff]
    %v708 = vld [vmem:[#allocation2 + $0x48] sm:$0xff]
    %v709 = vld [vmem:[#allocation2 + $0x50] sm:$0xff]
    %v710 = vld [vmem:[#allocation2 + $0x58] sm:$0xff]
    %v711 = vld [vmem:[#allocation2 + $0x60] sm:$0xff]
    %v712 = vld [vmem:[#allocation2 + $0x68] sm:$0xff]
    %v713 = vld [vmem:[#allocation2 + $0x70] sm:$0xff]
    %v714 = vld [vmem:[#allocation2 + $0x78] sm:$0xff]
    %v715 = vld [vmem:[#allocation2 + $0x80] sm:$0xff]
    %v716 = vld [vmem:[#allocation2 + $0x88] sm:$0xff]
    %v717 = vld [vmem:[#allocation2 + $0x90] sm:$0xff]
    %v718 = vld [vmem:[#allocation2 + $0x98] sm:$0xff]
    %v719 = vld [vmem:[#allocation2 + $0xa0] sm:$0xff]
    %v720 = vld [vmem:[#allocation2 + $0xa8] sm:$0xff]
    %v721 = vld [vmem:[#allocation2 + $0xb0] sm:$0xff]
    %v722 = vld [vmem:[#allocation2 + $0xb8] sm:$0xff]
    %v723 = vld [vmem:[#allocation2 + $0xc0] sm:$0xff]
    %v724 = vld [vmem:[#allocation2 + $0xc8] sm:$0xff]
    %v725 = vld [vmem:[#allocation2 + $0xd0] sm:$0xff]
    %v726 = vld [vmem:[#allocation2 + $0xd8] sm:$0xff]
    %v727 = vld [vmem:[#allocation2 + $0xe0] sm:$0xff]
    %v728 = vld [vmem:[#allocation2 + $0xe8] sm:$0xff]
    %v729 = vld [vmem:[#allocation2 + $0xf0] sm:$0xff]
    %v730 = vld [vmem:[#allocation2 + $0xf8] sm:$0xff]
    %v731 = vmax.f32 %v699, 0.0
    %v732 = vmax.f32 %v700, 0.0
    %v733 = vmax.f32 %v701, 0.0
    %v734 = vmax.f32 %v702, 0.0
    %v735 = vmax.f32 %v703, 0.0
    %v736 = vmax.f32 %v704, 0.0
    %v737 = vmax.f32 %v705, 0.0
    %v738 = vmax.f32 %v706, 0.0
    %v739 = vmax.f32 %v707, 0.0
    %v740 = vmax.f32 %v708, 0.0
    %v741 = vmax.f32 %v709, 0.0
    %v742 = vmax.f32 %v710, 0.0
    %v743 = vmax.f32 %v711, 0.0
    %v744 = vmax.f32 %v712, 0.0
    %v745 = vmax.f32 %v713, 0.0
    %v746 = vmax.f32 %v714, 0.0
    %v747 = vmax.f32 %v715, 0.0
    %v748 = vmax.f32 %v716, 0.0
    %v749 = vmax.f32 %v717, 0.0
    %v750 = vmax.f32 %v718, 0.0
    %v751 = vmax.f32 %v719, 0.0
    %v752 = vmax.f32 %v720, 0.0
    %v753 = vmax.f32 %v721, 0.0
    %v754 = vmax.f32 %v722, 0.0
    %v755 = vmax.f32 %v723, 0.0
    %v756 = vmax.f32 %v724, 0.0
    %v757 = vmax.f32 %v725, 0.0
    %v758 = vmax.f32 %v726, 0.0
    %v759 = vmax.f32 %v727, 0.0
    %v760 = vmax.f32 %v728, 0.0
    %v761 = vmax.f32 %v729, 0.0
    %v762 = vmax.f32 %v730, 0.0
    %v763 = vpack.c.bf16 %v733, %v731
    %v764 = vpack.c.bf16 %v734, %v732
    %v765 = vpack.c.bf16 %v737, %v735
    %v766 = vpack.c.bf16 %v738, %v736
    %v767 = vpack.c.bf16 %v741, %v739
    %v768 = vpack.c.bf16 %v742, %v740
    %v769 = vpack.c.bf16 %v745, %v743
    %v770 = vpack.c.bf16 %v746, %v744
    %v771 = vpack.c.bf16 %v749, %v747
    %v772 = vpack.c.bf16 %v750, %v748
    %v773 = vpack.c.bf16 %v753, %v751
    %v774 = vpack.c.bf16 %v754, %v752
    %v775 = vpack.c.bf16 %v757, %v755
    %v776 = vpack.c.bf16 %v758, %v756
    %v777 = vpack.c.bf16 %v761, %v759
    %v778 = vpack.c.bf16 %v762, %v760
    %v795 = vunpack.c.l.b16 %v763
    %v796 = vunpack.c.l.b16 %v764
    %v797 = vunpack.c.h.b16 %v763
    %v798 = vunpack.c.h.b16 %v764
    %v799 = vunpack.c.l.b16 %v765
    %v800 = vunpack.c.l.b16 %v766
    %v801 = vunpack.c.h.b16 %v765
    %v802 = vunpack.c.h.b16 %v766
    %v803 = vunpack.c.l.b16 %v767
    %v804 = vunpack.c.l.b16 %v768
    %v805 = vunpack.c.h.b16 %v767
    %v806 = vunpack.c.h.b16 %v768
    %v807 = vunpack.c.l.b16 %v769
    %v808 = vunpack.c.l.b16 %v770
    %v809 = vunpack.c.h.b16 %v769
    %v810 = vunpack.c.h.b16 %v770
    %v811 = vunpack.c.l.b16 %v771
    %v812 = vunpack.c.l.b16 %v772
    %v813 = vunpack.c.h.b16 %v771
    %v814 = vunpack.c.h.b16 %v772
    %v815 = vunpack.c.l.b16 %v773
    %v816 = vunpack.c.l.b16 %v774
    %v817 = vunpack.c.h.b16 %v773
    %v818 = vunpack.c.h.b16 %v774
    %v819 = vunpack.c.l.b16 %v775
    %v820 = vunpack.c.l.b16 %v776
    %v821 = vunpack.c.h.b16 %v775
    %v822 = vunpack.c.h.b16 %v776
    %v823 = vunpack.c.l.b16 %v777
    %v824 = vunpack.c.l.b16 %v778
    %v825 = vunpack.c.h.b16 %v777
    %v826 = vunpack.c.h.b16 %v778
    %v827 = vpack.c.b16 %v796, %v795
    %v828 = vpack.c.b16 %v798, %v797
    %v829 = vpack.c.b16 %v800, %v799
    %v830 = vpack.c.b16 %v802, %v801
    %v831 = vpack.c.b16 %v804, %v803
    %v832 = vpack.c.b16 %v806, %v805
    %v833 = vpack.c.b16 %v808, %v807
    %v834 = vpack.c.b16 %v810, %v809
    %v835 = vpack.c.b16 %v812, %v811
    %v836 = vpack.c.b16 %v814, %v813
    %v837 = vpack.c.b16 %v816, %v815
    %v838 = vpack.c.b16 %v818, %v817
    %v839 = vpack.c.b16 %v820, %v819
    %v840 = vpack.c.b16 %v822, %v821
    %v841 = vpack.c.b16 %v824, %v823
    %v842 = vpack.c.b16 %v826, %v825
    %859 = vst [vmem:[%s4] sm:$0xff] %v827
    %860 = vst [vmem:[%s4 + $0x8] sm:$0xff] %v828
    %861 = vst [vmem:[%s4 + $0x10] sm:$0xff] %v829
    %862 = vst [vmem:[%s4 + $0x18] sm:$0xff] %v830
    %863 = vst [vmem:[%s4 + $0x20] sm:$0xff] %v831
    %864 = vst [vmem:[%s4 + $0x28] sm:$0xff] %v832
    %865 = vst [vmem:[%s4 + $0x30] sm:$0xff] %v833
    %866 = vst [vmem:[%s4 + $0x38] sm:$0xff] %v834
    %867 = vst [vmem:[%s4 + $0x40] sm:$0xff] %v835
    %868 = vst [vmem:[%s4 + $0x48] sm:$0xff] %v836
    %869 = vst [vmem:[%s4 + $0x50] sm:$0xff] %v837
    %870 = vst [vmem:[%s4 + $0x58] sm:$0xff] %v838
    %871 = vst [vmem:[%s4 + $0x60] sm:$0xff] %v839
    %872 = vst [vmem:[%s4 + $0x68] sm:$0xff] %v840
    %873 = vst [vmem:[%s4 + $0x70] sm:$0xff] %v841
    %874 = vst [vmem:[%s4 + $0x78] sm:$0xff] %v842
  $region25: #{gcn_encoder_forward.5} parent=0 // pred_fallthru
    _
  // Predicated region
  $region26: #{gcn_encoder_forward.5} parent=0 // pred_check
    _
  $region27: #{gcn_encoder_forward.5} parent=0 // pred_check_branch
    %876 = sbr.rel (0) target = $region29
  $region28: #{gcn_encoder_forward.5} parent=0 // pred_region
    _
  $region29: #{gcn_encoder_forward.5} parent=0 // pred_fallthru
    _
  // Predicated region
  $region30: #{gcn_encoder_forward.5} parent=0 // pred_check
    _
  $region31: #{gcn_encoder_forward.5} parent=0 // pred_check_branch
    %878 = sbr.rel (0) target = $region33
  $region32: #{gcn_encoder_forward.5} parent=0 // pred_region
    _
  $region33: #{gcn_encoder_forward.5} parent=0 // pred_fallthru
    _

// kernel: gcn_encoder_forward.4
$region0: #{gcn_encoder_forward.4}
  #allocation0 [shape = 'u32[]', space=smem, size = 0x4, offset = 0x4, fixed_abs, tag = 'smem constant byte address 0x4 - core index']
  #allocation1 [shape = 'u32[144,128]{1,0:T(1,128)}', space=vmem, size = 0x12000, scoped, tag = 'internal scratch']
  #allocation2 [shape = 'f32[128,256]{1,0:T(8,128)}', space=vmem, size = 0x20000, scoped, tag = 'scratch operand']
  %s0 = inlined_call_operand.vmem [shape: bf16[128,128], index: 0, kind: input, shape index: {}]
  %s1 = inlined_call_operand.vmem [shape: bf16[128,256], index: 1, kind: input, shape index: {}]
  %s2 = inlined_call_operand.vmem [shape: bf16[128,128], index: 2, kind: input, shape index: {}]
  %s3 = inlined_call_operand.vmem [shape: bf16[128,256], index: 3, kind: input, shape index: {}]
  %s4 = inlined_call_operand.vmem [shape: bf16[256,256], index: 4, kind: input, shape index: {}]
  %s5 = inlined_call_operand.vmem [shape: bf16[128,256], index: 5, kind: output, shape index: {0}]
  %s6 = inlined_call_operand.vmem [shape: bf16[128,256], index: 6, kind: output, shape index: {1}]
  %7 = xla_tuple %s5, %s6
  %s8 = sld [smem:[#allocation0]]
  $region46: #{gcn_encoder_forward.4} parent=0
    _
  %s10 = ssub.s32 1, %s8
  %s11 = scalar_select 0, %s10, %s8
  // Predicated region
  $region2: #{gcn_encoder_forward.4} parent=0 // pred_check
    _
  $region3: #{gcn_encoder_forward.4} parent=0 // pred_check_branch
    %13 = sbr.rel (0) target = $region5
  $region4: #{gcn_encoder_forward.4} parent=0 // pred_region
    _
  $region5: #{gcn_encoder_forward.4} parent=0 // pred_fallthru
    _
  // Predicated region
  $region6: #{gcn_encoder_forward.4} parent=0 // pred_check
    _
  $region7: #{gcn_encoder_forward.4} parent=0 // pred_check_branch
    %15 = sbr.rel (0) target = $region9
  $region8: #{gcn_encoder_forward.4} parent=0 // pred_region
    _
  $region9: #{gcn_encoder_forward.4} parent=0 // pred_fallthru
    _
  // Predicated region
  $region10: #{gcn_encoder_forward.4} parent=0 // pred_check
    _
  $region11: #{gcn_encoder_forward.4} parent=0 // pred_check_branch
    %17 = sbr.rel (0) target = $region13
  $region12: #{gcn_encoder_forward.4} parent=0 // pred_region
    _
  $region13: #{gcn_encoder_forward.4} parent=0 // pred_fallthru
    _
  // Predicated region
  $region14: #{gcn_encoder_forward.4} parent=0 // pred_check
    _
  $region15: #{gcn_encoder_forward.4} parent=0 // pred_check_branch
    %19 = sbr.rel (0) target = $region17
  $region16: #{gcn_encoder_forward.4} parent=0 // pred_region
    _
  $region17: #{gcn_encoder_forward.4} parent=0 // pred_fallthru
    _
  // Predicated region
  $region18: #{gcn_encoder_forward.4} parent=0 // pred_check
    _
  $region19: #{gcn_encoder_forward.4} parent=0 // pred_check_branch
    %21 = sbr.rel (0) target = $region21
  $region20: #{gcn_encoder_forward.4} parent=0 // pred_region
    _
  $region21: #{gcn_encoder_forward.4} parent=0 // pred_fallthru
    _
  %p23 = scmp.eq.s32.totalorder 0, 0
  // Predicated region
  $region22: #{gcn_encoder_forward.4} parent=0 // pred_check
    %p24 = pneg %p23
  $region23: #{gcn_encoder_forward.4} parent=0 // pred_check_branch
    %26 = sbr.rel (%p24) target = $region25
  $region24: #{gcn_encoder_forward.4} parent=0 // pred_region
    %v27 = vld [vmem:[%s2] sm:$0xf]
    %v28 = vld [vmem:[%s2 + $0x4] sm:$0xf]
    %v29 = vld [vmem:[%s2 + $0x8] sm:$0xf]
    %v30 = vld [vmem:[%s2 + $0xc] sm:$0xf]
    %v31 = vld [vmem:[%s2 + $0x10] sm:$0xf]
    %v32 = vld [vmem:[%s2 + $0x14] sm:$0xf]
    %v33 = vld [vmem:[%s2 + $0x18] sm:$0xf]
    %v34 = vld [vmem:[%s2 + $0x1c] sm:$0xf]
    %v35 = vld [vmem:[%s2 + $0x20] sm:$0xf]
    %v36 = vld [vmem:[%s2 + $0x24] sm:$0xf]
    %v37 = vld [vmem:[%s2 + $0x28] sm:$0xf]
    %v38 = vld [vmem:[%s2 + $0x2c] sm:$0xf]
    %v39 = vld [vmem:[%s2 + $0x30] sm:$0xf]
    %v40 = vld [vmem:[%s2 + $0x34] sm:$0xf]
    %v41 = vld [vmem:[%s2 + $0x38] sm:$0xf]
    %v42 = vld [vmem:[%s2 + $0x3c] sm:$0xf]
    %v43 = vld [vmem:[%s3] sm:$0xff]
    %v44 = vld [vmem:[%s3 + $0x8] sm:$0xff]
    %v45 = vld [vmem:[%s3 + $0x10] sm:$0xff]
    %v46 = vld [vmem:[%s3 + $0x18] sm:$0xff]
    %v47 = vld [vmem:[%s3 + $0x20] sm:$0xff]
    %v48 = vld [vmem:[%s3 + $0x28] sm:$0xff]
    %v49 = vld [vmem:[%s3 + $0x30] sm:$0xff]
    %v50 = vld [vmem:[%s3 + $0x38] sm:$0xff]
    %v51 = vld [vmem:[%s3 + $0x40] sm:$0xff]
    %v52 = vld [vmem:[%s3 + $0x48] sm:$0xff]
    %v53 = vld [vmem:[%s3 + $0x50] sm:$0xff]
    %v54 = vld [vmem:[%s3 + $0x58] sm:$0xff]
    %v55 = vld [vmem:[%s3 + $0x60] sm:$0xff]
    %v56 = vld [vmem:[%s3 + $0x68] sm:$0xff]
    %v57 = vld [vmem:[%s3 + $0x70] sm:$0xff]
    %v58 = vld [vmem:[%s3 + $0x78] sm:$0xff]
    %v75 = vunpack.c.l.b16 %v27
    %v76 = vunpack.c.l.b16 %v28
    %v77 = vunpack.c.l.b16 %v29
    %v78 = vunpack.c.l.b16 %v30
    %v79 = vunpack.c.l.b16 %v31
    %v80 = vunpack.c.l.b16 %v32
    %v81 = vunpack.c.l.b16 %v33
    %v82 = vunpack.c.l.b16 %v34
    %v83 = vunpack.c.l.b16 %v35
    %v84 = vunpack.c.l.b16 %v36
    %v85 = vunpack.c.l.b16 %v37
    %v86 = vunpack.c.l.b16 %v38
    %v87 = vunpack.c.l.b16 %v39
    %v88 = vunpack.c.l.b16 %v40
    %v89 = vunpack.c.l.b16 %v41
    %v90 = vunpack.c.l.b16 %v42
    %v91 = vpack.c.b16 %v76, %v75
    %v92 = vpack.c.b16 %v78, %v77
    %v93 = vpack.c.b16 %v80, %v79
    %v94 = vpack.c.b16 %v82, %v81
    %v95 = vpack.c.b16 %v84, %v83
    %v96 = vpack.c.b16 %v86, %v85
    %v97 = vpack.c.b16 %v88, %v87
    %v98 = vpack.c.b16 %v90, %v89
    %v123 = vunpack.c.l.b16 %v43
    %v124 = vunpack.c.h.b16 %v43
    %v125 = vunpack.c.l.b16 %v44
    %v126 = vunpack.c.h.b16 %v44
    %v127 = vunpack.c.l.b16 %v45
    %v128 = vunpack.c.h.b16 %v45
    %v129 = vunpack.c.l.b16 %v46
    %v130 = vunpack.c.h.b16 %v46
    %v131 = vunpack.c.l.b16 %v47
    %v132 = vunpack.c.h.b16 %v47
    %v133 = vunpack.c.l.b16 %v48
    %v134 = vunpack.c.h.b16 %v48
    %v135 = vunpack.c.l.b16 %v49
    %v136 = vunpack.c.h.b16 %v49
    %v137 = vunpack.c.l.b16 %v50
    %v138 = vunpack.c.h.b16 %v50
    %v139 = vunpack.c.l.b16 %v51
    %v140 = vunpack.c.h.b16 %v51
    %v141 = vunpack.c.l.b16 %v52
    %v142 = vunpack.c.h.b16 %v52
    %v143 = vunpack.c.l.b16 %v53
    %v144 = vunpack.c.h.b16 %v53
    %v145 = vunpack.c.l.b16 %v54
    %v146 = vunpack.c.h.b16 %v54
    %v147 = vunpack.c.l.b16 %v55
    %v148 = vunpack.c.h.b16 %v55
    %v149 = vunpack.c.l.b16 %v56
    %v150 = vunpack.c.h.b16 %v56
    %v151 = vunpack.c.l.b16 %v57
    %v152 = vunpack.c.h.b16 %v57
    %v153 = vunpack.c.l.b16 %v58
    %v154 = vunpack.c.h.b16 %v58
    %v155 = vpack.c.b16 %v125, %v123
    %v156 = vpack.c.b16 %v126, %v124
    %v157 = vpack.c.b16 %v129, %v127
    %v158 = vpack.c.b16 %v130, %v128
    %v159 = vpack.c.b16 %v133, %v131
    %v160 = vpack.c.b16 %v134, %v132
    %v161 = vpack.c.b16 %v137, %v135
    %v162 = vpack.c.b16 %v138, %v136
    %v163 = vpack.c.b16 %v141, %v139
    %v164 = vpack.c.b16 %v142, %v140
    %v165 = vpack.c.b16 %v145, %v143
    %v166 = vpack.c.b16 %v146, %v144
    %v167 = vpack.c.b16 %v149, %v147
    %v168 = vpack.c.b16 %v150, %v148
    %v169 = vpack.c.b16 %v153, %v151
    %v170 = vpack.c.b16 %v154, %v152
    %187 = vmatprep.subr.bf16.mxu0 %v156
    %188 = vmatpush1.bf16.msra.mxu0 %v155
    %189 = vmatprep.subr.bf16.mxu0 %v158
    %190 = vmatpush1.bf16.msra.mxu0 %v157
    %191 = vmatprep.subr.bf16.mxu0 %v160
    %192 = vmatpush1.bf16.msra.mxu0 %v159
    %193 = vmatprep.subr.bf16.mxu0 %v162
    %194 = vmatpush1.bf16.msra.mxu0 %v161
    %195 = vmatprep.subr.bf16.mxu0 %v164
    %196 = vmatpush1.bf16.msra.mxu0 %v163
    %197 = vmatprep.subr.bf16.mxu0 %v166
    %198 = vmatpush1.bf16.msra.mxu0 %v165
    %199 = vmatprep.subr.bf16.mxu0 %v168
    %200 = vmatpush1.bf16.msra.mxu0 %v167
    %201 = vmatprep.subr.bf16.mxu0 %v170
    %202 = vmatpush1.bf16.msra.mxu0 %v169
    %203 = vmatprep.subr.bf16.mxu0 0
    %204 = vmatpush1.bf16.msra.mxu0 0
    %205 = vmatprep.subr.bf16.mxu0 0
    %206 = vmatpush1.bf16.msra.mxu0 0
    %207 = vmatprep.subr.bf16.mxu0 0
    %208 = vmatpush1.bf16.msra.mxu0 0
    %209 = vmatprep.subr.bf16.mxu0 0
    %210 = vmatpush1.bf16.msra.mxu0 0
    %211 = vmatprep.subr.bf16.mxu0 0
    %212 = vmatpush1.bf16.msra.mxu0 0
    %213 = vmatprep.subr.bf16.mxu0 0
    %214 = vmatpush1.bf16.msra.mxu0 0
    %215 = vmatprep.subr.bf16.mxu0 0
    %216 = vmatpush1.bf16.msra.mxu0 0
    %217 = vmatprep.subr.bf16.mxu0 0
    %218 = vmatpush1.bf16.msra.mxu0 0
    %219 = vmatprep.mubr.bf16.mxu0 0
    %220 = vmatmul.mubr.bf16.gmra.mrb[0].mxu0 %v91
    %v221 = vpop.f32.mrb[0].mxu0
    %v222 = vadd.f32 0.0, %v221
    %v223 = vpop.f32.mrb[0].mxu0
    %v224 = vadd.f32 0.0, %v223
    %v225 = vpop.f32.mrb[0].mxu0
    %v226 = vadd.f32 0.0, %v225
    %v227 = vpop.f32.mrb[0].mxu0
    %v228 = vadd.f32 0.0, %v227
    %229 = vmatprep.mubr.bf16.mxu0 0
    %230 = vmatmul.mubr.bf16.gmra.mrb[0].mxu0 %v92
    %v231 = vpop.f32.mrb[0].mxu0
    %v232 = vadd.f32 0.0, %v231
    %v233 = vpop.f32.mrb[0].mxu0
    %v234 = vadd.f32 0.0, %v233
    %v235 = vpop.f32.mrb[0].mxu0
    %v236 = vadd.f32 0.0, %v235
    %v237 = vpop.f32.mrb[0].mxu0
    %v238 = vadd.f32 0.0, %v237
    %239 = vmatprep.mubr.bf16.mxu0 0
    %240 = vmatmul.mubr.bf16.gmra.mrb[0].mxu0 %v93
    %v241 = vpop.f32.mrb[0].mxu0
    %v242 = vadd.f32 0.0, %v241
    %v243 = vpop.f32.mrb[0].mxu0
    %v244 = vadd.f32 0.0, %v243
    %v245 = vpop.f32.mrb[0].mxu0
    %v246 = vadd.f32 0.0, %v245
    %v247 = vpop.f32.mrb[0].mxu0
    %v248 = vadd.f32 0.0, %v247
    %249 = vmatprep.mubr.bf16.mxu0 0
    %250 = vmatmul.mubr.bf16.gmra.mrb[0].mxu0 %v94
    %v251 = vpop.f32.mrb[0].mxu0
    %v252 = vadd.f32 0.0, %v251
    %v253 = vpop.f32.mrb[0].mxu0
    %v254 = vadd.f32 0.0, %v253
    %v255 = vpop.f32.mrb[0].mxu0
    %v256 = vadd.f32 0.0, %v255
    %v257 = vpop.f32.mrb[0].mxu0
    %v258 = vadd.f32 0.0, %v257
    %259 = vmatprep.mubr.bf16.mxu0 0
    %260 = vmatmul.mubr.bf16.gmra.mrb[0].mxu0 %v95
    %v261 = vpop.f32.mrb[0].mxu0
    %v262 = vadd.f32 0.0, %v261
    %v263 = vpop.f32.mrb[0].mxu0
    %v264 = vadd.f32 0.0, %v263
    %v265 = vpop.f32.mrb[0].mxu0
    %v266 = vadd.f32 0.0, %v265
    %v267 = vpop.f32.mrb[0].mxu0
    %v268 = vadd.f32 0.0, %v267
    %269 = vmatprep.mubr.bf16.mxu0 0
    %270 = vmatmul.mubr.bf16.gmra.mrb[0].mxu0 %v96
    %v271 = vpop.f32.mrb[0].mxu0
    %v272 = vadd.f32 0.0, %v271
    %v273 = vpop.f32.mrb[0].mxu0
    %v274 = vadd.f32 0.0, %v273
    %v275 = vpop.f32.mrb[0].mxu0
    %v276 = vadd.f32 0.0, %v275
    %v277 = vpop.f32.mrb[0].mxu0
    %v278 = vadd.f32 0.0, %v277
    %279 = vmatprep.mubr.bf16.mxu0 0
    %280 = vmatmul.mubr.bf16.gmra.mrb[0].mxu0 %v97
    %v281 = vpop.f32.mrb[0].mxu0
    %v282 = vadd.f32 0.0, %v281
    %v283 = vpop.f32.mrb[0].mxu0
    %v284 = vadd.f32 0.0, %v283
    %v285 = vpop.f32.mrb[0].mxu0
    %v286 = vadd.f32 0.0, %v285
    %v287 = vpop.f32.mrb[0].mxu0
    %v288 = vadd.f32 0.0, %v287
    %289 = vmatprep.mubr.bf16.mxu0 0
    %290 = vmatmul.mubr.bf16.gmra.mrb[0].mxu0 %v98
    %v291 = vpop.f32.mrb[0].mxu0
    %v292 = vadd.f32 0.0, %v291
    %v293 = vpop.f32.mrb[0].mxu0
    %v294 = vadd.f32 0.0, %v293
    %v295 = vpop.f32.mrb[0].mxu0
    %v296 = vadd.f32 0.0, %v295
    %v297 = vpop.f32.mrb[0].mxu0
    %v298 = vadd.f32 0.0, %v297
    %299 = vdwg.mxu0
    %300 = vst [vmem:[#allocation2] sm:$0xff] %v222
    %301 = vst [vmem:[#allocation2 + $0x8] sm:$0xff] %v224
    %302 = vst [vmem:[#allocation2 + $0x10] sm:$0xff] %v226
    %303 = vst [vmem:[#allocation2 + $0x18] sm:$0xff] %v228
    %304 = vst [vmem:[#allocation2 + $0x20] sm:$0xff] %v232
    %305 = vst [vmem:[#allocation2 + $0x28] sm:$0xff] %v234
    %306 = vst [vmem:[#allocation2 + $0x30] sm:$0xff] %v236
    %307 = vst [vmem:[#allocation2 + $0x38] sm:$0xff] %v238
    %308 = vst [vmem:[#allocation2 + $0x40] sm:$0xff] %v242
    %309 = vst [vmem:[#allocation2 + $0x48] sm:$0xff] %v244
    %310 = vst [vmem:[#allocation2 + $0x50] sm:$0xff] %v246
    %311 = vst [vmem:[#allocation2 + $0x58] sm:$0xff] %v248
    %312 = vst [vmem:[#allocation2 + $0x60] sm:$0xff] %v252
    %313 = vst [vmem:[#allocation2 + $0x68] sm:$0xff] %v254
    %314 = vst [vmem:[#allocation2 + $0x70] sm:$0xff] %v256
    %315 = vst [vmem:[#allocation2 + $0x78] sm:$0xff] %v258
    %316 = vst [vmem:[#allocation2 + $0x80] sm:$0xff] %v262
    %317 = vst [vmem:[#allocation2 + $0x88] sm:$0xff] %v264
    %318 = vst [vmem:[#allocation2 + $0x90] sm:$0xff] %v266
    %319 = vst [vmem:[#allocation2 + $0x98] sm:$0xff] %v268
    %320 = vst [vmem:[#allocation2 + $0xa0] sm:$0xff] %v272
    %321 = vst [vmem:[#allocation2 + $0xa8] sm:$0xff] %v274
    %322 = vst [vmem:[#allocation2 + $0xb0] sm:$0xff] %v276
    %323 = vst [vmem:[#allocation2 + $0xb8] sm:$0xff] %v278
    %324 = vst [vmem:[#allocation2 + $0xc0] sm:$0xff] %v282
    %325 = vst [vmem:[#allocation2 + $0xc8] sm:$0xff] %v284
    %326 = vst [vmem:[#allocation2 + $0xd0] sm:$0xff] %v286
    %327 = vst [vmem:[#allocation2 + $0xd8] sm:$0xff] %v288
    %328 = vst [vmem:[#allocation2 + $0xe0] sm:$0xff] %v292
    %329 = vst [vmem:[#allocation2 + $0xe8] sm:$0xff] %v294
    %330 = vst [vmem:[#allocation2 + $0xf0] sm:$0xff] %v296
    %331 = vst [vmem:[#allocation2 + $0xf8] sm:$0xff] %v298
  $region25: #{gcn_encoder_forward.4} parent=0 // pred_fallthru
    _
  %v332 = vld [vmem:[#allocation2] sm:$0xff]
  %v333 = vld [vmem:[#allocation2 + $0x8] sm:$0xff]
  %v334 = vld [vmem:[#allocation2 + $0x10] sm:$0xff]
  %v335 = vld [vmem:[#allocation2 + $0x18] sm:$0xff]
  %v336 = vld [vmem:[#allocation2 + $0x20] sm:$0xff]
  %v337 = vld [vmem:[#allocation2 + $0x28] sm:$0xff]
  %v338 = vld [vmem:[#allocation2 + $0x30] sm:$0xff]
  %v339 = vld [vmem:[#allocation2 + $0x38] sm:$0xff]
  %v340 = vld [vmem:[#allocation2 + $0x40] sm:$0xff]
  %v341 = vld [vmem:[#allocation2 + $0x48] sm:$0xff]
  %v342 = vld [vmem:[#allocation2 + $0x50] sm:$0xff]
  %v343 = vld [vmem:[#allocation2 + $0x58] sm:$0xff]
  %v344 = vld [vmem:[#allocation2 + $0x60] sm:$0xff]
  %v345 = vld [vmem:[#allocation2 + $0x68] sm:$0xff]
  %v346 = vld [vmem:[#allocation2 + $0x70] sm:$0xff]
  %v347 = vld [vmem:[#allocation2 + $0x78] sm:$0xff]
  %v348 = vld [vmem:[#allocation2 + $0x80] sm:$0xff]
  %v349 = vld [vmem:[#allocation2 + $0x88] sm:$0xff]
  %v350 = vld [vmem:[#allocation2 + $0x90] sm:$0xff]
  %v351 = vld [vmem:[#allocation2 + $0x98] sm:$0xff]
  %v352 = vld [vmem:[#allocation2 + $0xa0] sm:$0xff]
  %v353 = vld [vmem:[#allocation2 + $0xa8] sm:$0xff]
  %v354 = vld [vmem:[#allocation2 + $0xb0] sm:$0xff]
  %v355 = vld [vmem:[#allocation2 + $0xb8] sm:$0xff]
  %v356 = vld [vmem:[#allocation2 + $0xc0] sm:$0xff]
  %v357 = vld [vmem:[#allocation2 + $0xc8] sm:$0xff]
  %v358 = vld [vmem:[#allocation2 + $0xd0] sm:$0xff]
  %v359 = vld [vmem:[#allocation2 + $0xd8] sm:$0xff]
  %v360 = vld [vmem:[#allocation2 + $0xe0] sm:$0xff]
  %v361 = vld [vmem:[#allocation2 + $0xe8] sm:$0xff]
  %v362 = vld [vmem:[#allocation2 + $0xf0] sm:$0xff]
  %v363 = vld [vmem:[#allocation2 + $0xf8] sm:$0xff]
  %v364 = vld [vmem:[%s0] sm:$0xf]
  %v365 = vld [vmem:[%s0 + $0x4] sm:$0xf]
  %v366 = vld [vmem:[%s0 + $0x8] sm:$0xf]
  %v367 = vld [vmem:[%s0 + $0xc] sm:$0xf]
  %v368 = vld [vmem:[%s0 + $0x10] sm:$0xf]
  %v369 = vld [vmem:[%s0 + $0x14] sm:$0xf]
  %v370 = vld [vmem:[%s0 + $0x18] sm:$0xf]
  %v371 = vld [vmem:[%s0 + $0x1c] sm:$0xf]
  %v372 = vld [vmem:[%s0 + $0x20] sm:$0xf]
  %v373 = vld [vmem:[%s0 + $0x24] sm:$0xf]
  %v374 = vld [vmem:[%s0 + $0x28] sm:$0xf]
  %v375 = vld [vmem:[%s0 + $0x2c] sm:$0xf]
  %v376 = vld [vmem:[%s0 + $0x30] sm:$0xf]
  %v377 = vld [vmem:[%s0 + $0x34] sm:$0xf]
  %v378 = vld [vmem:[%s0 + $0x38] sm:$0xf]
  %v379 = vld [vmem:[%s0 + $0x3c] sm:$0xf]
  %v380 = vld [vmem:[%s1] sm:$0xff]
  %v381 = vld [vmem:[%s1 + $0x8] sm:$0xff]
  %v382 = vld [vmem:[%s1 + $0x10] sm:$0xff]
  %v383 = vld [vmem:[%s1 + $0x18] sm:$0xff]
  %v384 = vld [vmem:[%s1 + $0x20] sm:$0xff]
  %v385 = vld [vmem:[%s1 + $0x28] sm:$0xff]
  %v386 = vld [vmem:[%s1 + $0x30] sm:$0xff]
  %v387 = vld [vmem:[%s1 + $0x38] sm:$0xff]
  %v388 = vld [vmem:[%s1 + $0x40] sm:$0xff]
  %v389 = vld [vmem:[%s1 + $0x48] sm:$0xff]
  %v390 = vld [vmem:[%s1 + $0x50] sm:$0xff]
  %v391 = vld [vmem:[%s1 + $0x58] sm:$0xff]
  %v392 = vld [vmem:[%s1 + $0x60] sm:$0xff]
  %v393 = vld [vmem:[%s1 + $0x68] sm:$0xff]
  %v394 = vld [vmem:[%s1 + $0x70] sm:$0xff]
  %v395 = vld [vmem:[%s1 + $0x78] sm:$0xff]
  %v412 = vunpack.c.l.b16 %v364
  %v413 = vunpack.c.l.b16 %v365
  %v414 = vunpack.c.l.b16 %v366
  %v415 = vunpack.c.l.b16 %v367
  %v416 = vunpack.c.l.b16 %v368
  %v417 = vunpack.c.l.b16 %v369
  %v418 = vunpack.c.l.b16 %v370
  %v419 = vunpack.c.l.b16 %v371
  %v420 = vunpack.c.l.b16 %v372
  %v421 = vunpack.c.l.b16 %v373
  %v422 = vunpack.c.l.b16 %v374
  %v423 = vunpack.c.l.b16 %v375
  %v424 = vunpack.c.l.b16 %v376
  %v425 = vunpack.c.l.b16 %v377
  %v426 = vunpack.c.l.b16 %v378
  %v427 = vunpack.c.l.b16 %v379
  %v428 = vpack.c.b16 %v413, %v412
  %v429 = vpack.c.b16 %v415, %v414
  %v430 = vpack.c.b16 %v417, %v416
  %v431 = vpack.c.b16 %v419, %v418
  %v432 = vpack.c.b16 %v421, %v420
  %v433 = vpack.c.b16 %v423, %v422
  %v434 = vpack.c.b16 %v425, %v424
  %v435 = vpack.c.b16 %v427, %v426
  %v460 = vunpack.c.l.b16 %v380
  %v461 = vunpack.c.h.b16 %v380
  %v462 = vunpack.c.l.b16 %v381
  %v463 = vunpack.c.h.b16 %v381
  %v464 = vunpack.c.l.b16 %v382
  %v465 = vunpack.c.h.b16 %v382
  %v466 = vunpack.c.l.b16 %v383
  %v467 = vunpack.c.h.b16 %v383
  %v468 = vunpack.c.l.b16 %v384
  %v469 = vunpack.c.h.b16 %v384
  %v470 = vunpack.c.l.b16 %v385
  %v471 = vunpack.c.h.b16 %v385
  %v472 = vunpack.c.l.b16 %v386
  %v473 = vunpack.c.h.b16 %v386
  %v474 = vunpack.c.l.b16 %v387
  %v475 = vunpack.c.h.b16 %v387
  %v476 = vunpack.c.l.b16 %v388
  %v477 = vunpack.c.h.b16 %v388
  %v478 = vunpack.c.l.b16 %v389
  %v479 = vunpack.c.h.b16 %v389
  %v480 = vunpack.c.l.b16 %v390
  %v481 = vunpack.c.h.b16 %v390
  %v482 = vunpack.c.l.b16 %v391
  %v483 = vunpack.c.h.b16 %v391
  %v484 = vunpack.c.l.b16 %v392
  %v485 = vunpack.c.h.b16 %v392
  %v486 = vunpack.c.l.b16 %v393
  %v487 = vunpack.c.h.b16 %v393
  %v488 = vunpack.c.l.b16 %v394
  %v489 = vunpack.c.h.b16 %v394
  %v490 = vunpack.c.l.b16 %v395
  %v491 = vunpack.c.h.b16 %v395
  %v492 = vpack.c.b16 %v462, %v460
  %v493 = vpack.c.b16 %v463, %v461
  %v494 = vpack.c.b16 %v466, %v464
  %v495 = vpack.c.b16 %v467, %v465
  %v496 = vpack.c.b16 %v470, %v468
  %v497 = vpack.c.b16 %v471, %v469
  %v498 = vpack.c.b16 %v474, %v472
  %v499 = vpack.c.b16 %v475, %v473
  %v500 = vpack.c.b16 %v478, %v476
  %v501 = vpack.c.b16 %v479, %v477
  %v502 = vpack.c.b16 %v482, %v480
  %v503 = vpack.c.b16 %v483, %v481
  %v504 = vpack.c.b16 %v486, %v484
  %v505 = vpack.c.b16 %v487, %v485
  %v506 = vpack.c.b16 %v490, %v488
  %v507 = vpack.c.b16 %v491, %v489
  %524 = vmatprep.subr.bf16.mxu0 %v493
  %525 = vmatpush1.bf16.msra.mxu0 %v492
  %526 = vmatprep.subr.bf16.mxu0 %v495
  %527 = vmatpush1.bf16.msra.mxu0 %v494
  %528 = vmatprep.subr.bf16.mxu0 %v497
  %529 = vmatpush1.bf16.msra.mxu0 %v496
  %530 = vmatprep.subr.bf16.mxu0 %v499
  %531 = vmatpush1.bf16.msra.mxu0 %v498
  %532 = vmatprep.subr.bf16.mxu0 %v501
  %533 = vmatpush1.bf16.msra.mxu0 %v500
  %534 = vmatprep.subr.bf16.mxu0 %v503
  %535 = vmatpush1.bf16.msra.mxu0 %v502
  %536 = vmatprep.subr.bf16.mxu0 %v505
  %537 = vmatpush1.bf16.msra.mxu0 %v504
  %538 = vmatprep.subr.bf16.mxu0 %v507
  %539 = vmatpush1.bf16.msra.mxu0 %v506
  %540 = vmatprep.subr.bf16.mxu0 0
  %541 = vmatpush1.bf16.msra.mxu0 0
  %542 = vmatprep.subr.bf16.mxu0 0
  %543 = vmatpush1.bf16.msra.mxu0 0
  %544 = vmatprep.subr.bf16.mxu0 0
  %545 = vmatpush1.bf16.msra.mxu0 0
  %546 = vmatprep.subr.bf16.mxu0 0
  %547 = vmatpush1.bf16.msra.mxu0 0
  %548 = vmatprep.subr.bf16.mxu0 0
  %549 = vmatpush1.bf16.msra.mxu0 0
  %550 = vmatprep.subr.bf16.mxu0 0
  %551 = vmatpush1.bf16.msra.mxu0 0
  %552 = vmatprep.subr.bf16.mxu0 0
  %553 = vmatpush1.bf16.msra.mxu0 0
  %554 = vmatprep.subr.bf16.mxu0 0
  %555 = vmatpush1.bf16.msra.mxu0 0
  %556 = vmatprep.mubr.bf16.mxu0 0
  %557 = vmatmul.mubr.bf16.gmra.mrb[0].mxu0 %v428
  %v558 = vpop.f32.mrb[0].mxu0
  %v559 = vadd.f32 0.0, %v558
  %v560 = vpop.f32.mrb[0].mxu0
  %v561 = vadd.f32 0.0, %v560
  %v562 = vpop.f32.mrb[0].mxu0
  %v563 = vadd.f32 0.0, %v562
  %v564 = vpop.f32.mrb[0].mxu0
  %v565 = vadd.f32 0.0, %v564
  %566 = vmatprep.mubr.bf16.mxu0 0
  %567 = vmatmul.mubr.bf16.gmra.mrb[0].mxu0 %v429
  %v568 = vpop.f32.mrb[0].mxu0
  %v569 = vadd.f32 0.0, %v568
  %v570 = vpop.f32.mrb[0].mxu0
  %v571 = vadd.f32 0.0, %v570
  %v572 = vpop.f32.mrb[0].mxu0
  %v573 = vadd.f32 0.0, %v572
  %v574 = vpop.f32.mrb[0].mxu0
  %v575 = vadd.f32 0.0, %v574
  %576 = vmatprep.mubr.bf16.mxu0 0
  %577 = vmatmul.mubr.bf16.gmra.mrb[0].mxu0 %v430
  %v578 = vpop.f32.mrb[0].mxu0
  %v579 = vadd.f32 0.0, %v578
  %v580 = vpop.f32.mrb[0].mxu0
  %v581 = vadd.f32 0.0, %v580
  %v582 = vpop.f32.mrb[0].mxu0
  %v583 = vadd.f32 0.0, %v582
  %v584 = vpop.f32.mrb[0].mxu0
  %v585 = vadd.f32 0.0, %v584
  %586 = vmatprep.mubr.bf16.mxu0 0
  %587 = vmatmul.mubr.bf16.gmra.mrb[0].mxu0 %v431
  %v588 = vpop.f32.mrb[0].mxu0
  %v589 = vadd.f32 0.0, %v588
  %v590 = vpop.f32.mrb[0].mxu0
  %v591 = vadd.f32 0.0, %v590
  %v592 = vpop.f32.mrb[0].mxu0
  %v593 = vadd.f32 0.0, %v592
  %v594 = vpop.f32.mrb[0].mxu0
  %v595 = vadd.f32 0.0, %v594
  %596 = vmatprep.mubr.bf16.mxu0 0
  %597 = vmatmul.mubr.bf16.gmra.mrb[0].mxu0 %v432
  %v598 = vpop.f32.mrb[0].mxu0
  %v599 = vadd.f32 0.0, %v598
  %v600 = vpop.f32.mrb[0].mxu0
  %v601 = vadd.f32 0.0, %v600
  %v602 = vpop.f32.mrb[0].mxu0
  %v603 = vadd.f32 0.0, %v602
  %v604 = vpop.f32.mrb[0].mxu0
  %v605 = vadd.f32 0.0, %v604
  %606 = vmatprep.mubr.bf16.mxu0 0
  %607 = vmatmul.mubr.bf16.gmra.mrb[0].mxu0 %v433
  %v608 = vpop.f32.mrb[0].mxu0
  %v609 = vadd.f32 0.0, %v608
  %v610 = vpop.f32.mrb[0].mxu0
  %v611 = vadd.f32 0.0, %v610
  %v612 = vpop.f32.mrb[0].mxu0
  %v613 = vadd.f32 0.0, %v612
  %v614 = vpop.f32.mrb[0].mxu0
  %v615 = vadd.f32 0.0, %v614
  %616 = vmatprep.mubr.bf16.mxu0 0
  %617 = vmatmul.mubr.bf16.gmra.mrb[0].mxu0 %v434
  %v618 = vpop.f32.mrb[0].mxu0
  %v619 = vadd.f32 0.0, %v618
  %v620 = vpop.f32.mrb[0].mxu0
  %v621 = vadd.f32 0.0, %v620
  %v622 = vpop.f32.mrb[0].mxu0
  %v623 = vadd.f32 0.0, %v622
  %v624 = vpop.f32.mrb[0].mxu0
  %v625 = vadd.f32 0.0, %v624
  %626 = vmatprep.mubr.bf16.mxu0 0
  %627 = vmatmul.mubr.bf16.gmra.mrb[0].mxu0 %v435
  %v628 = vpop.f32.mrb[0].mxu0
  %v629 = vadd.f32 0.0, %v628
  %v630 = vpop.f32.mrb[0].mxu0
  %v631 = vadd.f32 0.0, %v630
  %v632 = vpop.f32.mrb[0].mxu0
  %v633 = vadd.f32 0.0, %v632
  %v634 = vpop.f32.mrb[0].mxu0
  %v635 = vadd.f32 0.0, %v634
  %636 = vdwg.mxu0
  %v637 = vadd.f32 %v332, %v559
  %v638 = vadd.f32 %v333, %v561
  %v639 = vadd.f32 %v334, %v563
  %v640 = vadd.f32 %v335, %v565
  %v641 = vadd.f32 %v336, %v569
  %v642 = vadd.f32 %v337, %v571
  %v643 = vadd.f32 %v338, %v573
  %v644 = vadd.f32 %v339, %v575
  %v645 = vadd.f32 %v340, %v579
  %v646 = vadd.f32 %v341, %v581
  %v647 = vadd.f32 %v342, %v583
  %v648 = vadd.f32 %v343, %v585
  %v649 = vadd.f32 %v344, %v589
  %v650 = vadd.f32 %v345, %v591
  %v651 = vadd.f32 %v346, %v593
  %v652 = vadd.f32 %v347, %v595
  %v653 = vadd.f32 %v348, %v599
  %v654 = vadd.f32 %v349, %v601
  %v655 = vadd.f32 %v350, %v603
  %v656 = vadd.f32 %v351, %v605
  %v657 = vadd.f32 %v352, %v609
  %v658 = vadd.f32 %v353, %v611
  %v659 = vadd.f32 %v354, %v613
  %v660 = vadd.f32 %v355, %v615
  %v661 = vadd.f32 %v356, %v619
  %v662 = vadd.f32 %v357, %v621
  %v663 = vadd.f32 %v358, %v623
  %v664 = vadd.f32 %v359, %v625
  %v665 = vadd.f32 %v360, %v629
  %v666 = vadd.f32 %v361, %v631
  %v667 = vadd.f32 %v362, %v633
  %v668 = vadd.f32 %v363, %v635
  %669 = vst [vmem:[#allocation2] sm:$0xff] %v637
  %670 = vst [vmem:[#allocation2 + $0x8] sm:$0xff] %v638
  %671 = vst [vmem:[#allocation2 + $0x10] sm:$0xff] %v639
  %672 = vst [vmem:[#allocation2 + $0x18] sm:$0xff] %v640
  %673 = vst [vmem:[#allocation2 + $0x20] sm:$0xff] %v641
  %674 = vst [vmem:[#allocation2 + $0x28] sm:$0xff] %v642
  %675 = vst [vmem:[#allocation2 + $0x30] sm:$0xff] %v643
  %676 = vst [vmem:[#allocation2 + $0x38] sm:$0xff] %v644
  %677 = vst [vmem:[#allocation2 + $0x40] sm:$0xff] %v645
  %678 = vst [vmem:[#allocation2 + $0x48] sm:$0xff] %v646
  %679 = vst [vmem:[#allocation2 + $0x50] sm:$0xff] %v647
  %680 = vst [vmem:[#allocation2 + $0x58] sm:$0xff] %v648
  %681 = vst [vmem:[#allocation2 + $0x60] sm:$0xff] %v649
  %682 = vst [vmem:[#allocation2 + $0x68] sm:$0xff] %v650
  %683 = vst [vmem:[#allocation2 + $0x70] sm:$0xff] %v651
  %684 = vst [vmem:[#allocation2 + $0x78] sm:$0xff] %v652
  %685 = vst [vmem:[#allocation2 + $0x80] sm:$0xff] %v653
  %686 = vst [vmem:[#allocation2 + $0x88] sm:$0xff] %v654
  %687 = vst [vmem:[#allocation2 + $0x90] sm:$0xff] %v655
  %688 = vst [vmem:[#allocation2 + $0x98] sm:$0xff] %v656
  %689 = vst [vmem:[#allocation2 + $0xa0] sm:$0xff] %v657
  %690 = vst [vmem:[#allocation2 + $0xa8] sm:$0xff] %v658
  %691 = vst [vmem:[#allocation2 + $0xb0] sm:$0xff] %v659
  %692 = vst [vmem:[#allocation2 + $0xb8] sm:$0xff] %v660
  %693 = vst [vmem:[#allocation2 + $0xc0] sm:$0xff] %v661
  %694 = vst [vmem:[#allocation2 + $0xc8] sm:$0xff] %v662
  %695 = vst [vmem:[#allocation2 + $0xd0] sm:$0xff] %v663
  %696 = vst [vmem:[#allocation2 + $0xd8] sm:$0xff] %v664
  %697 = vst [vmem:[#allocation2 + $0xe0] sm:$0xff] %v665
  %698 = vst [vmem:[#allocation2 + $0xe8] sm:$0xff] %v666
  %699 = vst [vmem:[#allocation2 + $0xf0] sm:$0xff] %v667
  %700 = vst [vmem:[#allocation2 + $0xf8] sm:$0xff] %v668
  // Predicated region
  $region26: #{gcn_encoder_forward.4} parent=0 // pred_check
    %p701 = pneg %p23
  $region27: #{gcn_encoder_forward.4} parent=0 // pred_check_branch
    %703 = sbr.rel (%p701) target = $region29
  $region28: #{gcn_encoder_forward.4} parent=0 // pred_region
    %v704 = vld [vmem:[#allocation2] sm:$0xff]
    %v705 = vld [vmem:[#allocation2 + $0x8] sm:$0xff]
    %v706 = vld [vmem:[#allocation2 + $0x10] sm:$0xff]
    %v707 = vld [vmem:[#allocation2 + $0x18] sm:$0xff]
    %v708 = vld [vmem:[#allocation2 + $0x20] sm:$0xff]
    %v709 = vld [vmem:[#allocation2 + $0x28] sm:$0xff]
    %v710 = vld [vmem:[#allocation2 + $0x30] sm:$0xff]
    %v711 = vld [vmem:[#allocation2 + $0x38] sm:$0xff]
    %v712 = vld [vmem:[#allocation2 + $0x40] sm:$0xff]
    %v713 = vld [vmem:[#allocation2 + $0x48] sm:$0xff]
    %v714 = vld [vmem:[#allocation2 + $0x50] sm:$0xff]
    %v715 = vld [vmem:[#allocation2 + $0x58] sm:$0xff]
    %v716 = vld [vmem:[#allocation2 + $0x60] sm:$0xff]
    %v717 = vld [vmem:[#allocation2 + $0x68] sm:$0xff]
    %v718 = vld [vmem:[#allocation2 + $0x70] sm:$0xff]
    %v719 = vld [vmem:[#allocation2 + $0x78] sm:$0xff]
    %v720 = vld [vmem:[#allocation2 + $0x80] sm:$0xff]
    %v721 = vld [vmem:[#allocation2 + $0x88] sm:$0xff]
    %v722 = vld [vmem:[#allocation2 + $0x90] sm:$0xff]
    %v723 = vld [vmem:[#allocation2 + $0x98] sm:$0xff]
    %v724 = vld [vmem:[#allocation2 + $0xa0] sm:$0xff]
    %v725 = vld [vmem:[#allocation2 + $0xa8] sm:$0xff]
    %v726 = vld [vmem:[#allocation2 + $0xb0] sm:$0xff]
    %v727 = vld [vmem:[#allocation2 + $0xb8] sm:$0xff]
    %v728 = vld [vmem:[#allocation2 + $0xc0] sm:$0xff]
    %v729 = vld [vmem:[#allocation2 + $0xc8] sm:$0xff]
    %v730 = vld [vmem:[#allocation2 + $0xd0] sm:$0xff]
    %v731 = vld [vmem:[#allocation2 + $0xd8] sm:$0xff]
    %v732 = vld [vmem:[#allocation2 + $0xe0] sm:$0xff]
    %v733 = vld [vmem:[#allocation2 + $0xe8] sm:$0xff]
    %v734 = vld [vmem:[#allocation2 + $0xf0] sm:$0xff]
    %v735 = vld [vmem:[#allocation2 + $0xf8] sm:$0xff]
    %v736 = vmax.f32 %v704, 0.0
    %v737 = vmax.f32 %v705, 0.0
    %v738 = vmax.f32 %v706, 0.0
    %v739 = vmax.f32 %v707, 0.0
    %v740 = vmax.f32 %v708, 0.0
    %v741 = vmax.f32 %v709, 0.0
    %v742 = vmax.f32 %v710, 0.0
    %v743 = vmax.f32 %v711, 0.0
    %v744 = vmax.f32 %v712, 0.0
    %v745 = vmax.f32 %v713, 0.0
    %v746 = vmax.f32 %v714, 0.0
    %v747 = vmax.f32 %v715, 0.0
    %v748 = vmax.f32 %v716, 0.0
    %v749 = vmax.f32 %v717, 0.0
    %v750 = vmax.f32 %v718, 0.0
    %v751 = vmax.f32 %v719, 0.0
    %v752 = vmax.f32 %v720, 0.0
    %v753 = vmax.f32 %v721, 0.0
    %v754 = vmax.f32 %v722, 0.0
    %v755 = vmax.f32 %v723, 0.0
    %v756 = vmax.f32 %v724, 0.0
    %v757 = vmax.f32 %v725, 0.0
    %v758 = vmax.f32 %v726, 0.0
    %v759 = vmax.f32 %v727, 0.0
    %v760 = vmax.f32 %v728, 0.0
    %v761 = vmax.f32 %v729, 0.0
    %v762 = vmax.f32 %v730, 0.0
    %v763 = vmax.f32 %v731, 0.0
    %v764 = vmax.f32 %v732, 0.0
    %v765 = vmax.f32 %v733, 0.0
    %v766 = vmax.f32 %v734, 0.0
    %v767 = vmax.f32 %v735, 0.0
    %v768 = vpack.c.bf16 %v738, %v736
    %v769 = vpack.c.bf16 %v739, %v737
    %v770 = vpack.c.bf16 %v742, %v740
    %v771 = vpack.c.bf16 %v743, %v741
    %v772 = vpack.c.bf16 %v746, %v744
    %v773 = vpack.c.bf16 %v747, %v745
    %v774 = vpack.c.bf16 %v750, %v748
    %v775 = vpack.c.bf16 %v751, %v749
    %v776 = vpack.c.bf16 %v754, %v752
    %v777 = vpack.c.bf16 %v755, %v753
    %v778 = vpack.c.bf16 %v758, %v756
    %v779 = vpack.c.bf16 %v759, %v757
    %v780 = vpack.c.bf16 %v762, %v760
    %v781 = vpack.c.bf16 %v763, %v761
    %v782 = vpack.c.bf16 %v766, %v764
    %v783 = vpack.c.bf16 %v767, %v765
    %v800 = vunpack.c.l.b16 %v768
    %v801 = vunpack.c.l.b16 %v769
    %v802 = vunpack.c.h.b16 %v768
    %v803 = vunpack.c.h.b16 %v769
    %v804 = vunpack.c.l.b16 %v770
    %v805 = vunpack.c.l.b16 %v771
    %v806 = vunpack.c.h.b16 %v770
    %v807 = vunpack.c.h.b16 %v771
    %v808 = vunpack.c.l.b16 %v772
    %v809 = vunpack.c.l.b16 %v773
    %v810 = vunpack.c.h.b16 %v772
    %v811 = vunpack.c.h.b16 %v773
    %v812 = vunpack.c.l.b16 %v774
    %v813 = vunpack.c.l.b16 %v775
    %v814 = vunpack.c.h.b16 %v774
    %v815 = vunpack.c.h.b16 %v775
    %v816 = vunpack.c.l.b16 %v776
    %v817 = vunpack.c.l.b16 %v777
    %v818 = vunpack.c.h.b16 %v776
    %v819 = vunpack.c.h.b16 %v777
    %v820 = vunpack.c.l.b16 %v778
    %v821 = vunpack.c.l.b16 %v779
    %v822 = vunpack.c.h.b16 %v778
    %v823 = vunpack.c.h.b16 %v779
    %v824 = vunpack.c.l.b16 %v780
    %v825 = vunpack.c.l.b16 %v781
    %v826 = vunpack.c.h.b16 %v780
    %v827 = vunpack.c.h.b16 %v781
    %v828 = vunpack.c.l.b16 %v782
    %v829 = vunpack.c.l.b16 %v783
    %v830 = vunpack.c.h.b16 %v782
    %v831 = vunpack.c.h.b16 %v783
    %v832 = vpack.c.b16 %v801, %v800
    %v833 = vpack.c.b16 %v803, %v802
    %v834 = vpack.c.b16 %v805, %v804
    %v835 = vpack.c.b16 %v807, %v806
    %v836 = vpack.c.b16 %v809, %v808
    %v837 = vpack.c.b16 %v811, %v810
    %v838 = vpack.c.b16 %v813, %v812
    %v839 = vpack.c.b16 %v815, %v814
    %v840 = vpack.c.b16 %v817, %v816
    %v841 = vpack.c.b16 %v819, %v818
    %v842 = vpack.c.b16 %v821, %v820
    %v843 = vpack.c.b16 %v823, %v822
    %v844 = vpack.c.b16 %v825, %v824
    %v845 = vpack.c.b16 %v827, %v826
    %v846 = vpack.c.b16 %v829, %v828
    %v847 = vpack.c.b16 %v831, %v830
    %864 = vst [vmem:[%s5] sm:$0xff] %v832
    %865 = vst [vmem:[%s5 + $0x8] sm:$0xff] %v833
    %866 = vst [vmem:[%s5 + $0x10] sm:$0xff] %v834
    %867 = vst [vmem:[%s5 + $0x18] sm:$0xff] %v835
    %868 = vst [vmem:[%s5 + $0x20] sm:$0xff] %v836
    %869 = vst [vmem:[%s5 + $0x28] sm:$0xff] %v837
    %870 = vst [vmem:[%s5 + $0x30] sm:$0xff] %v838
    %871 = vst [vmem:[%s5 + $0x38] sm:$0xff] %v839
    %872 = vst [vmem:[%s5 + $0x40] sm:$0xff] %v840
    %873 = vst [vmem:[%s5 + $0x48] sm:$0xff] %v841
    %874 = vst [vmem:[%s5 + $0x50] sm:$0xff] %v842
    %875 = vst [vmem:[%s5 + $0x58] sm:$0xff] %v843
    %876 = vst [vmem:[%s5 + $0x60] sm:$0xff] %v844
    %877 = vst [vmem:[%s5 + $0x68] sm:$0xff] %v845
    %878 = vst [vmem:[%s5 + $0x70] sm:$0xff] %v846
    %879 = vst [vmem:[%s5 + $0x78] sm:$0xff] %v847
    %v880 = vld [vmem:[%s4] sm:$0xff]
    %v881 = vld [vmem:[%s4 + $0x8] sm:$0xff]
    %v882 = vld [vmem:[%s4 + $0x10] sm:$0xff]
    %v883 = vld [vmem:[%s4 + $0x18] sm:$0xff]
    %v884 = vld [vmem:[%s4 + $0x20] sm:$0xff]
    %v885 = vld [vmem:[%s4 + $0x28] sm:$0xff]
    %v886 = vld [vmem:[%s4 + $0x30] sm:$0xff]
    %v887 = vld [vmem:[%s4 + $0x38] sm:$0xff]
    %v888 = vld [vmem:[%s4 + $0x40] sm:$0xff]
    %v889 = vld [vmem:[%s4 + $0x48] sm:$0xff]
    %v890 = vld [vmem:[%s4 + $0x50] sm:$0xff]
    %v891 = vld [vmem:[%s4 + $0x58] sm:$0xff]
    %v892 = vld [vmem:[%s4 + $0x60] sm:$0xff]
    %v893 = vld [vmem:[%s4 + $0x68] sm:$0xff]
    %v894 = vld [vmem:[%s4 + $0x70] sm:$0xff]
    %v895 = vld [vmem:[%s4 + $0x78] sm:$0xff]
    %v896 = vld [vmem:[%s4 + $0x80] sm:$0xff]
    %v897 = vld [vmem:[%s4 + $0x88] sm:$0xff]
    %v898 = vld [vmem:[%s4 + $0x90] sm:$0xff]
    %v899 = vld [vmem:[%s4 + $0x98] sm:$0xff]
    %v900 = vld [vmem:[%s4 + $0xa0] sm:$0xff]
    %v901 = vld [vmem:[%s4 + $0xa8] sm:$0xff]
    %v902 = vld [vmem:[%s4 + $0xb0] sm:$0xff]
    %v903 = vld [vmem:[%s4 + $0xb8] sm:$0xff]
    %v904 = vld [vmem:[%s4 + $0xc0] sm:$0xff]
    %v905 = vld [vmem:[%s4 + $0xc8] sm:$0xff]
    %v906 = vld [vmem:[%s4 + $0xd0] sm:$0xff]
    %v907 = vld [vmem:[%s4 + $0xd8] sm:$0xff]
    %v908 = vld [vmem:[%s4 + $0xe0] sm:$0xff]
    %v909 = vld [vmem:[%s4 + $0xe8] sm:$0xff]
    %v910 = vld [vmem:[%s4 + $0xf0] sm:$0xff]
    %v911 = vld [vmem:[%s4 + $0xf8] sm:$0xff]
    %v944 = vunpack.c.l.b16 %v880
    %v945 = vunpack.c.h.b16 %v880
    %v946 = vunpack.c.l.b16 %v881
    %v947 = vunpack.c.h.b16 %v881
    %v948 = vunpack.c.l.b16 %v882
    %v949 = vunpack.c.h.b16 %v882
    %v950 = vunpack.c.l.b16 %v883
    %v951 = vunpack.c.h.b16 %v883
    %v952 = vunpack.c.l.b16 %v884
    %v953 = vunpack.c.h.b16 %v884
    %v954 = vunpack.c.l.b16 %v885
    %v955 = vunpack.c.h.b16 %v885
    %v956 = vunpack.c.l.b16 %v886
    %v957 = vunpack.c.h.b16 %v886
    %v958 = vunpack.c.l.b16 %v887
    %v959 = vunpack.c.h.b16 %v887
    %v960 = vunpack.c.l.b16 %v888
    %v961 = vunpack.c.h.b16 %v888
    %v962 = vunpack.c.l.b16 %v889
    %v963 = vunpack.c.h.b16 %v889
    %v964 = vunpack.c.l.b16 %v890
    %v965 = vunpack.c.h.b16 %v890
    %v966 = vunpack.c.l.b16 %v891
    %v967 = vunpack.c.h.b16 %v891
    %v968 = vunpack.c.l.b16 %v892
    %v969 = vunpack.c.h.b16 %v892
    %v970 = vunpack.c.l.b16 %v893
    %v971 = vunpack.c.h.b16 %v893
    %v972 = vunpack.c.l.b16 %v894
    %v973 = vunpack.c.h.b16 %v894
    %v974 = vunpack.c.l.b16 %v895
    %v975 = vunpack.c.h.b16 %v895
    %v976 = vunpack.c.l.b16 %v896
    %v977 = vunpack.c.h.b16 %v896
    %v978 = vunpack.c.l.b16 %v897
    %v979 = vunpack.c.h.b16 %v897
    %v980 = vunpack.c.l.b16 %v898
    %v981 = vunpack.c.h.b16 %v898
    %v982 = vunpack.c.l.b16 %v899
    %v983 = vunpack.c.h.b16 %v899
    %v984 = vunpack.c.l.b16 %v900
    %v985 = vunpack.c.h.b16 %v900
    %v986 = vunpack.c.l.b16 %v901
    %v987 = vunpack.c.h.b16 %v901
    %v988 = vunpack.c.l.b16 %v902
    %v989 = vunpack.c.h.b16 %v902
    %v990 = vunpack.c.l.b16 %v903
    %v991 = vunpack.c.h.b16 %v903
    %v992 = vunpack.c.l.b16 %v904
    %v993 = vunpack.c.h.b16 %v904
    %v994 = vunpack.c.l.b16 %v905
    %v995 = vunpack.c.h.b16 %v905
    %v996 = vunpack.c.l.b16 %v906
    %v997 = vunpack.c.h.b16 %v906
    %v998 = vunpack.c.l.b16 %v907
    %v999 = vunpack.c.h.b16 %v907
    %v1000 = vunpack.c.l.b16 %v908
    %v1001 = vunpack.c.h.b16 %v908
    %v1002 = vunpack.c.l.b16 %v909
    %v1003 = vunpack.c.h.b16 %v909
    %v1004 = vunpack.c.l.b16 %v910
    %v1005 = vunpack.c.h.b16 %v910
    %v1006 = vunpack.c.l.b16 %v911
    %v1007 = vunpack.c.h.b16 %v911
    %v1008 = vpack.c.b16 %v946, %v944
    %v1009 = vpack.c.b16 %v947, %v945
    %v1010 = vpack.c.b16 %v950, %v948
    %v1011 = vpack.c.b16 %v951, %v949
    %v1012 = vpack.c.b16 %v954, %v952
    %v1013 = vpack.c.b16 %v955, %v953
    %v1014 = vpack.c.b16 %v958, %v956
    %v1015 = vpack.c.b16 %v959, %v957
    %v1016 = vpack.c.b16 %v962, %v960
    %v1017 = vpack.c.b16 %v963, %v961
    %v1018 = vpack.c.b16 %v966, %v964
    %v1019 = vpack.c.b16 %v967, %v965
    %v1020 = vpack.c.b16 %v970, %v968
    %v1021 = vpack.c.b16 %v971, %v969
    %v1022 = vpack.c.b16 %v974, %v972
    %v1023 = vpack.c.b16 %v975, %v973
    %v1024 = vpack.c.b16 %v978, %v976
    %v1025 = vpack.c.b16 %v979, %v977
    %v1026 = vpack.c.b16 %v982, %v980
    %v1027 = vpack.c.b16 %v983, %v981
    %v1028 = vpack.c.b16 %v986, %v984
    %v1029 = vpack.c.b16 %v987, %v985
    %v1030 = vpack.c.b16 %v990, %v988
    %v1031 = vpack.c.b16 %v991, %v989
    %v1032 = vpack.c.b16 %v994, %v992
    %v1033 = vpack.c.b16 %v995, %v993
    %v1034 = vpack.c.b16 %v998, %v996
    %v1035 = vpack.c.b16 %v999, %v997
    %v1036 = vpack.c.b16 %v1002, %v1000
    %v1037 = vpack.c.b16 %v1003, %v1001
    %v1038 = vpack.c.b16 %v1006, %v1004
    %v1039 = vpack.c.b16 %v1007, %v1005
    %1072 = vmatprep.subr.bf16.mxu0 %v1009
    %1073 = vmatpush1.bf16.msra.mxu0 %v1008
    %1074 = vmatprep.subr.bf16.mxu0 %v1011
    %1075 = vmatpush1.bf16.msra.mxu0 %v1010
    %1076 = vmatprep.subr.bf16.mxu0 %v1013
    %1077 = vmatpush1.bf16.msra.mxu0 %v1012
    %1078 = vmatprep.subr.bf16.mxu0 %v1015
    %1079 = vmatpush1.bf16.msra.mxu0 %v1014
    %1080 = vmatprep.subr.bf16.mxu0 %v1017
    %1081 = vmatpush1.bf16.msra.mxu0 %v1016
    %1082 = vmatprep.subr.bf16.mxu0 %v1019
    %1083 = vmatpush1.bf16.msra.mxu0 %v1018
    %1084 = vmatprep.subr.bf16.mxu0 %v1021
    %1085 = vmatpush1.bf16.msra.mxu0 %v1020
    %1086 = vmatprep.subr.bf16.mxu0 %v1023
    %1087 = vmatpush1.bf16.msra.mxu0 %v1022
    %1088 = vmatprep.subr.bf16.mxu0 %v1025
    %1089 = vmatpush1.bf16.msra.mxu0 %v1024
    %1090 = vmatprep.subr.bf16.mxu0 %v1027
    %1091 = vmatpush1.bf16.msra.mxu0 %v1026
    %1092 = vmatprep.subr.bf16.mxu0 %v1029
    %1093 = vmatpush1.bf16.msra.mxu0 %v1028
    %1094 = vmatprep.subr.bf16.mxu0 %v1031
    %1095 = vmatpush1.bf16.msra.mxu0 %v1030
    %1096 = vmatprep.subr.bf16.mxu0 %v1033
    %1097 = vmatpush1.bf16.msra.mxu0 %v1032
    %1098 = vmatprep.subr.bf16.mxu0 %v1035
    %1099 = vmatpush1.bf16.msra.mxu0 %v1034
    %1100 = vmatprep.subr.bf16.mxu0 %v1037
    %1101 = vmatpush1.bf16.msra.mxu0 %v1036
    %1102 = vmatprep.subr.bf16.mxu0 %v1039
    %1103 = vmatpush1.bf16.msra.mxu0 %v1038
    %1104 = vmatprep.mubr.bf16.mxu0 %v769
    %1105 = vmatmul.mubr.bf16.gmra.mrb[0].mxu0 %v768
    %v1106 = vpop.f32.mrb[0].mxu0
    %v1107 = vadd.f32 0.0, %v1106
    %v1108 = vpop.f32.mrb[0].mxu0
    %v1109 = vadd.f32 0.0, %v1108
    %v1110 = vpop.f32.mrb[0].mxu0
    %v1111 = vadd.f32 0.0, %v1110
    %v1112 = vpop.f32.mrb[0].mxu0
    %v1113 = vadd.f32 0.0, %v1112
    %1114 = vmatprep.mubr.bf16.mxu0 %v771
    %1115 = vmatmul.mubr.bf16.gmra.mrb[0].mxu0 %v770
    %v1116 = vpop.f32.mrb[0].mxu0
    %v1117 = vadd.f32 0.0, %v1116
    %v1118 = vpop.f32.mrb[0].mxu0
    %v1119 = vadd.f32 0.0, %v1118
    %v1120 = vpop.f32.mrb[0].mxu0
    %v1121 = vadd.f32 0.0, %v1120
    %v1122 = vpop.f32.mrb[0].mxu0
    %v1123 = vadd.f32 0.0, %v1122
    %1124 = vmatprep.mubr.bf16.mxu0 %v773
    %1125 = vmatmul.mubr.bf16.gmra.mrb[0].mxu0 %v772
    %v1126 = vpop.f32.mrb[0].mxu0
    %v1127 = vadd.f32 0.0, %v1126
    %v1128 = vpop.f32.mrb[0].mxu0
    %v1129 = vadd.f32 0.0, %v1128
    %v1130 = vpop.f32.mrb[0].mxu0
    %v1131 = vadd.f32 0.0, %v1130
    %v1132 = vpop.f32.mrb[0].mxu0
    %v1133 = vadd.f32 0.0, %v1132
    %1134 = vmatprep.mubr.bf16.mxu0 %v775
    %1135 = vmatmul.mubr.bf16.gmra.mrb[0].mxu0 %v774
    %v1136 = vpop.f32.mrb[0].mxu0
    %v1137 = vadd.f32 0.0, %v1136
    %v1138 = vpop.f32.mrb[0].mxu0
    %v1139 = vadd.f32 0.0, %v1138
    %v1140 = vpop.f32.mrb[0].mxu0
    %v1141 = vadd.f32 0.0, %v1140
    %v1142 = vpop.f32.mrb[0].mxu0
    %v1143 = vadd.f32 0.0, %v1142
    %1144 = vmatprep.mubr.bf16.mxu0 %v777
    %1145 = vmatmul.mubr.bf16.gmra.mrb[0].mxu0 %v776
    %v1146 = vpop.f32.mrb[0].mxu0
    %v1147 = vadd.f32 0.0, %v1146
    %v1148 = vpop.f32.mrb[0].mxu0
    %v1149 = vadd.f32 0.0, %v1148
    %v1150 = vpop.f32.mrb[0].mxu0
    %v1151 = vadd.f32 0.0, %v1150
    %v1152 = vpop.f32.mrb[0].mxu0
    %v1153 = vadd.f32 0.0, %v1152
    %1154 = vmatprep.mubr.bf16.mxu0 %v779
    %1155 = vmatmul.mubr.bf16.gmra.mrb[0].mxu0 %v778
    %v1156 = vpop.f32.mrb[0].mxu0
    %v1157 = vadd.f32 0.0, %v1156
    %v1158 = vpop.f32.mrb[0].mxu0
    %v1159 = vadd.f32 0.0, %v1158
    %v1160 = vpop.f32.mrb[0].mxu0
    %v1161 = vadd.f32 0.0, %v1160
    %v1162 = vpop.f32.mrb[0].mxu0
    %v1163 = vadd.f32 0.0, %v1162
    %1164 = vmatprep.mubr.bf16.mxu0 %v781
    %1165 = vmatmul.mubr.bf16.gmra.mrb[0].mxu0 %v780
    %v1166 = vpop.f32.mrb[0].mxu0
    %v1167 = vadd.f32 0.0, %v1166
    %v1168 = vpop.f32.mrb[0].mxu0
    %v1169 = vadd.f32 0.0, %v1168
    %v1170 = vpop.f32.mrb[0].mxu0
    %v1171 = vadd.f32 0.0, %v1170
    %v1172 = vpop.f32.mrb[0].mxu0
    %v1173 = vadd.f32 0.0, %v1172
    %1174 = vmatprep.mubr.bf16.mxu0 %v783
    %1175 = vmatmul.mubr.bf16.gmra.mrb[0].mxu0 %v782
    %v1176 = vpop.f32.mrb[0].mxu0
    %v1177 = vadd.f32 0.0, %v1176
    %v1178 = vpop.f32.mrb[0].mxu0
    %v1179 = vadd.f32 0.0, %v1178
    %v1180 = vpop.f32.mrb[0].mxu0
    %v1181 = vadd.f32 0.0, %v1180
    %v1182 = vpop.f32.mrb[0].mxu0
    %v1183 = vadd.f32 0.0, %v1182
    %1184 = vdwg.mxu0
    %v1185 = vpack.c.bf16 %v1111, %v1107
    %v1186 = vpack.c.bf16 %v1113, %v1109
    %v1187 = vpack.c.bf16 %v1121, %v1117
    %v1188 = vpack.c.bf16 %v1123, %v1119
    %v1189 = vpack.c.bf16 %v1131, %v1127
    %v1190 = vpack.c.bf16 %v1133, %v1129
    %v1191 = vpack.c.bf16 %v1141, %v1137
    %v1192 = vpack.c.bf16 %v1143, %v1139
    %v1193 = vpack.c.bf16 %v1151, %v1147
    %v1194 = vpack.c.bf16 %v1153, %v1149
    %v1195 = vpack.c.bf16 %v1161, %v1157
    %v1196 = vpack.c.bf16 %v1163, %v1159
    %v1197 = vpack.c.bf16 %v1171, %v1167
    %v1198 = vpack.c.bf16 %v1173, %v1169
    %v1199 = vpack.c.bf16 %v1181, %v1177
    %v1200 = vpack.c.bf16 %v1183, %v1179
    %v1217 = vunpack.c.l.b16 %v1185
    %v1218 = vunpack.c.l.b16 %v1186
    %v1219 = vunpack.c.h.b16 %v1185
    %v1220 = vunpack.c.h.b16 %v1186
    %v1221 = vunpack.c.l.b16 %v1187
    %v1222 = vunpack.c.l.b16 %v1188
    %v1223 = vunpack.c.h.b16 %v1187
    %v1224 = vunpack.c.h.b16 %v1188
    %v1225 = vunpack.c.l.b16 %v1189
    %v1226 = vunpack.c.l.b16 %v1190
    %v1227 = vunpack.c.h.b16 %v1189
    %v1228 = vunpack.c.h.b16 %v1190
    %v1229 = vunpack.c.l.b16 %v1191
    %v1230 = vunpack.c.l.b16 %v1192
    %v1231 = vunpack.c.h.b16 %v1191
    %v1232 = vunpack.c.h.b16 %v1192
    %v1233 = vunpack.c.l.b16 %v1193
    %v1234 = vunpack.c.l.b16 %v1194
    %v1235 = vunpack.c.h.b16 %v1193
    %v1236 = vunpack.c.h.b16 %v1194
    %v1237 = vunpack.c.l.b16 %v1195
    %v1238 = vunpack.c.l.b16 %v1196
    %v1239 = vunpack.c.h.b16 %v1195
    %v1240 = vunpack.c.h.b16 %v1196
    %v1241 = vunpack.c.l.b16 %v1197
    %v1242 = vunpack.c.l.b16 %v1198
    %v1243 = vunpack.c.h.b16 %v1197
    %v1244 = vunpack.c.h.b16 %v1198
    %v1245 = vunpack.c.l.b16 %v1199
    %v1246 = vunpack.c.l.b16 %v1200
    %v1247 = vunpack.c.h.b16 %v1199
    %v1248 = vunpack.c.h.b16 %v1200
    %v1249 = vpack.c.b16 %v1218, %v1217
    %v1250 = vpack.c.b16 %v1220, %v1219
    %v1251 = vpack.c.b16 %v1222, %v1221
    %v1252 = vpack.c.b16 %v1224, %v1223
    %v1253 = vpack.c.b16 %v1226, %v1225
    %v1254 = vpack.c.b16 %v1228, %v1227
    %v1255 = vpack.c.b16 %v1230, %v1229
    %v1256 = vpack.c.b16 %v1232, %v1231
    %v1257 = vpack.c.b16 %v1234, %v1233
    %v1258 = vpack.c.b16 %v1236, %v1235
    %v1259 = vpack.c.b16 %v1238, %v1237
    %v1260 = vpack.c.b16 %v1240, %v1239
    %v1261 = vpack.c.b16 %v1242, %v1241
    %v1262 = vpack.c.b16 %v1244, %v1243
    %v1263 = vpack.c.b16 %v1246, %v1245
    %v1264 = vpack.c.b16 %v1248, %v1247
    %1281 = vst [vmem:[%s6] sm:$0xff] %v1249
    %1282 = vst [vmem:[%s6 + $0x8] sm:$0xff] %v1250
    %1283 = vst [vmem:[%s6 + $0x10] sm:$0xff] %v1251
    %1284 = vst [vmem:[%s6 + $0x18] sm:$0xff] %v1252
    %1285 = vst [vmem:[%s6 + $0x20] sm:$0xff] %v1253
    %1286 = vst [vmem:[%s6 + $0x28] sm:$0xff] %v1254
    %1287 = vst [vmem:[%s6 + $0x30] sm:$0xff] %v1255
    %1288 = vst [vmem:[%s6 + $0x38] sm:$0xff] %v1256
    %1289 = vst [vmem:[%s6 + $0x40] sm:$0xff] %v1257
    %1290 = vst [vmem:[%s6 + $0x48] sm:$0xff] %v1258
    %1291 = vst [vmem:[%s6 + $0x50] sm:$0xff] %v1259
    %1292 = vst [vmem:[%s6 + $0x58] sm:$0xff] %v1260
    %1293 = vst [vmem:[%s6 + $0x60] sm:$0xff] %v1261
    %1294 = vst [vmem:[%s6 + $0x68] sm:$0xff] %v1262
    %1295 = vst [vmem:[%s6 + $0x70] sm:$0xff] %v1263
    %1296 = vst [vmem:[%s6 + $0x78] sm:$0xff] %v1264
  $region29: #{gcn_encoder_forward.4} parent=0 // pred_fallthru
    _
  // Predicated region
  $region30: #{gcn_encoder_forward.4} parent=0 // pred_check
    _
  $region31: #{gcn_encoder_forward.4} parent=0 // pred_check_branch
    %1298 = sbr.rel (0) target = $region33
  $region32: #{gcn_encoder_forward.4} parent=0 // pred_region
    _
  $region33: #{gcn_encoder_forward.4} parent=0 // pred_fallthru
    _
  // Predicated region
  $region34: #{gcn_encoder_forward.4} parent=0 // pred_check
    _
  $region35: #{gcn_encoder_forward.4} parent=0 // pred_check_branch
    %1300 = sbr.rel (0) target = $region37
  $region36: #{gcn_encoder_forward.4} parent=0 // pred_region
    _
  $region37: #{gcn_encoder_forward.4} parent=0 // pred_fallthru
    _
  // Predicated region
  $region38: #{gcn_encoder_forward.4} parent=0 // pred_check
    _
  $region39: #{gcn_encoder_forward.4} parent=0 // pred_check_branch
    %1302 = sbr.rel (0) target = $region41
  $region40: #{gcn_encoder_forward.4} parent=0 // pred_region
    _
  $region41: #{gcn_encoder_forward.4} parent=0 // pred_fallthru
    _
  // Predicated region
  $region42: #{gcn_encoder_forward.4} parent=0 // pred_check
    _
  $region43: #{gcn_encoder_forward.4} parent=0 // pred_check_branch
    %1304 = sbr.rel (0) target = $region45
  $region44: #{gcn_encoder_forward.4} parent=0 // pred_region
    _
  $region45: #{gcn_encoder_forward.4} parent=0 // pred_fallthru
    _

</llo_original>
